<compile_context>
chip_gen: v7x
topology: tpu7x:2x2x1
jax: 0.10.0
libtpu: 0.0.40
codegen_flags: <defaults>
</compile_context>

<pallas_src>
import functools

import jax
import jax.numpy as jnp
from jax.experimental import pallas as pl
from jax.experimental.pallas import tpu as pltpu

INPUT_SIZE = 28 * 28        # 784
HIDDEN_SIZE = 128
LATENT_SIZE = 16
IN_PAD = 896                # 7 * 128: lane-dense padding of the 784 dim


def _round_up(x, m):
    return (x + m - 1) // m * m


def _vae_kernel(
    x_ref,        # [TB, IN_PAD]            bf16
    eps_ref,      # [TB, LATENT_SIZE]       f32
    w_enc_ref,    # [IN_PAD, HIDDEN]        bf16
    b_enc_ref,    # [1, HIDDEN]             f32
    w_ms_ref,     # [HIDDEN, 2*LATENT]      bf16   (w_mu || w_sigma fused)
    b_ms_ref,     # [1, 2*LATENT]           f32
    w_d1_ref,     # [LATENT, HIDDEN]        bf16
    b_d1_ref,     # [1, HIDDEN]             f32
    w_d2_ref,     # [HIDDEN, IN_PAD]        bf16
    b_d2_ref,     # [1, IN_PAD]             f32
    rex_ref,      # out: [TB, IN_PAD]       f32
    musig_ref,    # out: [TB, 2*LATENT]     f32   (mu || sigma packed)
):
    bf16 = jnp.bfloat16

    # ---- Encoder ----
    h = jnp.dot(x_ref[...], w_enc_ref[...], preferred_element_type=jnp.float32)
    h = jnp.maximum(h + b_enc_ref[...], 0.0)                         # ReLU, f32

    # Fused mu/sigma projection (one N=32 matmul instead of two N=16 ones).
    musig = jnp.dot(h.astype(bf16), w_ms_ref[...],
                    preferred_element_type=jnp.float32) + b_ms_ref[...]
    mu = musig[:, :LATENT_SIZE]
    sigma = musig[:, LATENT_SIZE:]

    # ---- Reparameterization: z = mu + eps * sigma (f32) ----
    z = mu + eps_ref[...] * sigma

    # ---- Decoder ----
    hd = jnp.dot(z.astype(bf16), w_d1_ref[...],
                 preferred_element_type=jnp.float32)
    hd = jnp.maximum(hd + b_d1_ref[...], 0.0)                        # ReLU, f32

    logits = jnp.dot(hd.astype(bf16), w_d2_ref[...],
                     preferred_element_type=jnp.float32) + b_d2_ref[...]
    rex_ref[...] = jax.nn.sigmoid(logits).astype(rex_ref.dtype)
    musig_ref[...] = musig.astype(musig_ref.dtype)


def pack_params(p):
    """Pad / fuse / bf16-cast raw f32 params into the kernel layout."""
    pad_in = IN_PAD - INPUT_SIZE
    return dict(
        w_enc=jnp.pad(p["w_enc"], ((0, pad_in), (0, 0))).astype(jnp.bfloat16),
        b_enc=p["b_enc"].astype(jnp.float32),
        w_ms=jnp.concatenate([p["w_mu"], p["w_sig"]], axis=1).astype(jnp.bfloat16),
        b_ms=jnp.concatenate([p["b_mu"], p["b_sig"]], axis=1).astype(jnp.float32),
        w_d1=p["w_d1"].astype(jnp.bfloat16),
        b_d1=p["b_d1"].astype(jnp.float32),
        w_d2=jnp.pad(p["w_d2"], ((0, 0), (0, pad_in))).astype(jnp.bfloat16),
        b_d2=jnp.pad(p["b_d2"], ((0, 0), (0, pad_in))).astype(jnp.float32),
    )


@functools.partial(jax.jit, static_argnames=("block_b",))
def vae_forward(x, eps, packed, *, block_b=256):
    """x: [B, 784] f32, eps: [B, 16] f32 (the torch.randn_like draw)."""
    B = x.shape[0]
    # Batch tile: multiple of 16 (bf16 sublane packing); small batches use one tile.
    TB = min(_round_up(block_b, 16), _round_up(B, 16))
    Bp = _round_up(B, TB)

    xp = jnp.pad(x, ((0, Bp - B), (0, IN_PAD - INPUT_SIZE))).astype(jnp.bfloat16)
    epsp = jnp.pad(eps, ((0, Bp - B), (0, 0))).astype(jnp.float32)

    row = lambda i: (i, 0)       # batch-tiled arrays
    const = lambda i: (0, 0)     # weights/biases: resident in VMEM across tiles

    rex_p, musig = pl.pallas_call(
        _vae_kernel,
        out_shape=(
            jax.ShapeDtypeStruct((Bp, IN_PAD), jnp.float32),
            jax.ShapeDtypeStruct((Bp, 2 * LATENT_SIZE), jnp.float32),
        ),
        grid=(Bp // TB,),
        in_specs=[
            pl.BlockSpec((TB, IN_PAD), row),                       # x
            pl.BlockSpec((TB, LATENT_SIZE), row),                  # eps
            pl.BlockSpec((IN_PAD, HIDDEN_SIZE), const),            # w_enc
            pl.BlockSpec((1, HIDDEN_SIZE), const),                 # b_enc
            pl.BlockSpec((HIDDEN_SIZE, 2 * LATENT_SIZE), const),   # w_mu||w_sig
            pl.BlockSpec((1, 2 * LATENT_SIZE), const),             # b_mu||b_sig
            pl.BlockSpec((LATENT_SIZE, HIDDEN_SIZE), const),       # w_d1
            pl.BlockSpec((1, HIDDEN_SIZE), const),                 # b_d1
            pl.BlockSpec((HIDDEN_SIZE, IN_PAD), const),            # w_d2
            pl.BlockSpec((1, IN_PAD), const),                      # b_d2
        ],
        out_specs=(
            pl.BlockSpec((TB, IN_PAD), row),                       # re_x (padded)
            pl.BlockSpec((TB, 2 * LATENT_SIZE), row),              # mu||sigma
        ),
        compiler_params=pltpu.CompilerParams(
            dimension_semantics=("parallel",)),                    # megacore on v7x
    )(xp, epsp,
      packed["w_enc"], packed["b_enc"],
      packed["w_ms"], packed["b_ms"],
      packed["w_d1"], packed["b_d1"],
      packed["w_d2"], packed["b_d2"])

    re_x = rex_p[:B, :INPUT_SIZE]
    mu = musig[:B, :LATENT_SIZE]
    sigma = musig[:B, LATENT_SIZE:]
    return re_x, mu, sigma


def _linear_init(key, fan_in, fan_out):
    """PyTorch nn.Linear default init: U(-1/sqrt(fan_in), 1/sqrt(fan_in))."""
    kw, kb = jax.random.split(key)
    bound = 1.0 / jnp.sqrt(jnp.float32(fan_in))
    w = jax.random.uniform(kw, (fan_in, fan_out), jnp.float32, -bound, bound)
    b = jax.random.uniform(kb, (1, fan_out), jnp.float32, -bound, bound)
    return w, b


def init_params(key):
    keys = jax.random.split(key, 5)
    w_enc, b_enc = _linear_init(keys[0], INPUT_SIZE, HIDDEN_SIZE)
    w_mu, b_mu = _linear_init(keys[1], HIDDEN_SIZE, LATENT_SIZE)
    w_sig, b_sig = _linear_init(keys[2], HIDDEN_SIZE, LATENT_SIZE)
    w_d1, b_d1 = _linear_init(keys[3], LATENT_SIZE, HIDDEN_SIZE)
    w_d2, b_d2 = _linear_init(keys[4], HIDDEN_SIZE, INPUT_SIZE)
    return dict(w_enc=w_enc, b_enc=b_enc, w_mu=w_mu, b_mu=b_mu,
                w_sig=w_sig, b_sig=b_sig, w_d1=w_d1, b_d1=b_d1,
                w_d2=w_d2, b_d2=b_d2)


def _reference_forward(x, eps, p):
    """Pure-JAX reference with the same bf16-operand / f32-accumulate matmuls."""
    bf = jnp.bfloat16

    def mm(a, w):
        return jnp.dot(a.astype(bf), w.astype(bf),
                       preferred_element_type=jnp.float32)

    h = jax.nn.relu(mm(x, p["w_enc"]) + p["b_enc"])
    mu = mm(h, p["w_mu"]) + p["b_mu"]
    sigma = mm(h, p["w_sig"]) + p["b_sig"]
    z = mu + eps * sigma
    hd = jax.nn.relu(mm(z, p["w_d1"]) + p["b_d1"])
    re_x = jax.nn.sigmoid(mm(hd, p["w_d2"]) + p["b_d2"])
    return re_x, mu, sigma


def _check(B, block_b, key):
    k_x, k_eps = jax.random.split(key)
    x = jax.random.uniform(k_x, (B, INPUT_SIZE), jnp.float32)       # MNIST-ish pixels
    eps = jax.random.normal(k_eps, (B, LATENT_SIZE), jnp.float32)   # randn_like(sigma)

    re_x, mu, sigma = vae_forward(x, eps, _PACKED, block_b=block_b)
    jax.block_until_ready((re_x, mu, sigma))

    r_rex, r_mu, r_sigma = _reference_forward(x, eps, _PARAMS)
    assert jnp.allclose(re_x, r_rex, atol=5e-3, rtol=5e-3)
    assert jnp.allclose(mu, r_mu, atol=5e-3, rtol=5e-3)
    assert jnp.allclose(sigma, r_sigma, atol=5e-3, rtol=5e-3)


if __name__ == "__main__":
    key = jax.random.PRNGKey(0)
    k_params, k_a, k_b = jax.random.split(key, 3)

    _PARAMS = init_params(k_params)
    _PACKED = pack_params(_PARAMS)

    # TODO(synk): eps (torch.randn_like) is drawn host-side with jax.random and
    # passed in; in-kernel pltpu PRNG sampling is possible but not needed here.

    _check(B=8, block_b=256, key=k_a)    # single-tile path (TB=16, grid=(1,))
    _check(B=40, block_b=16, key=k_b)    # multi-tile path  (TB=16, grid=(3,))

    print("KERNEL_OK")
</pallas_src>

<mosaic_0001>
module attributes {stable_mosaic.version = 11 : i64} {
  func.func @_vae_kernel(%arg0: i32, %arg1: memref<16x896xbf16, #tpu.memory_space<vmem>>, %arg2: memref<16x16xf32, #tpu.memory_space<vmem>>, %arg3: memref<896x128xbf16, #tpu.memory_space<vmem>>, %arg4: memref<1x128xf32, #tpu.memory_space<vmem>>, %arg5: memref<128x32xbf16, #tpu.memory_space<vmem>>, %arg6: memref<1x32xf32, #tpu.memory_space<vmem>>, %arg7: memref<16x128xbf16, #tpu.memory_space<vmem>>, %arg8: memref<1x128xf32, #tpu.memory_space<vmem>>, %arg9: memref<128x896xbf16, #tpu.memory_space<vmem>>, %arg10: memref<1x896xf32, #tpu.memory_space<vmem>>, %arg11: memref<16x896xf32, #tpu.memory_space<vmem>>, %arg12: memref<16x32xf32, #tpu.memory_space<vmem>>) attributes {dimension_semantics = [#tpu.dimension_semantics<parallel>], iteration_bounds = array<i64: 1>, scalar_prefetch = 0 : i64, scratch_operands = 0 : i64, tpu.core_type = #tpu.core_type<tc>, window_params = [{transform_indices = @transform_0, window_bounds = array<i64: 16, 896>}, {transform_indices = @transform_1, window_bounds = array<i64: 16, 16>}, {pipeline_mode = #tpu.pipeline_mode<synchronous>, transform_indices = @transform_2, window_bounds = array<i64: 896, 128>}, {pipeline_mode = #tpu.pipeline_mode<synchronous>, transform_indices = @transform_3, window_bounds = array<i64: 1, 128>}, {pipeline_mode = #tpu.pipeline_mode<synchronous>, transform_indices = @transform_4, window_bounds = array<i64: 128, 32>}, {pipeline_mode = #tpu.pipeline_mode<synchronous>, transform_indices = @transform_5, window_bounds = array<i64: 1, 32>}, {pipeline_mode = #tpu.pipeline_mode<synchronous>, transform_indices = @transform_6, window_bounds = array<i64: 16, 128>}, {pipeline_mode = #tpu.pipeline_mode<synchronous>, transform_indices = @transform_7, window_bounds = array<i64: 1, 128>}, {pipeline_mode = #tpu.pipeline_mode<synchronous>, transform_indices = @transform_8, window_bounds = array<i64: 128, 896>}, {pipeline_mode = #tpu.pipeline_mode<synchronous>, transform_indices = @transform_9, window_bounds = array<i64: 1, 896>}, {transform_indices = @transform_10, window_bounds = array<i64: 16, 896>}, {transform_indices = @transform_11, window_bounds = array<i64: 16, 32>}]} {
    %c0 = arith.constant 0 : index
    %c0_0 = arith.constant 0 : index
    %0 = vector.load %arg1[%c0, %c0_0] : memref<16x896xbf16, #tpu.memory_space<vmem>>, vector<16x896xbf16>
    %c0_1 = arith.constant 0 : index
    %c0_2 = arith.constant 0 : index
    %1 = vector.load %arg3[%c0_1, %c0_2] : memref<896x128xbf16, #tpu.memory_space<vmem>>, vector<896x128xbf16>
    %cst = arith.constant dense<0.000000e+00> : vector<16x128xf32>
    %2 = tpu.matmul %0, %1, %cst {dimension_numbers = #tpu.dot_dimension_numbers<[1], [0], [0], [1], [0, 0, 1, 1], [], []>} : vector<16x896xbf16>, vector<896x128xbf16>, vector<16x128xf32> -> vector<16x128xf32>
    %c0_3 = arith.constant 0 : index
    %c0_4 = arith.constant 0 : index
    %3 = vector.load %arg4[%c0_3, %c0_4] : memref<1x128xf32, #tpu.memory_space<vmem>>, vector<1x128xf32>
    %4 = vector.broadcast %3 : vector<1x128xf32> to vector<16x128xf32>
    %5 = arith.addf %2, %4 : vector<16x128xf32>
    %cst_5 = arith.constant 0.000000e+00 : f32
    %6 = vector.broadcast %cst_5 : f32 to vector<16x128xf32>
    %7 = arith.maximumf %5, %6 : vector<16x128xf32>
    %8 = arith.truncf %7 : vector<16x128xf32> to vector<16x128xbf16>
    %c0_6 = arith.constant 0 : index
    %c0_7 = arith.constant 0 : index
    %9 = vector.load %arg5[%c0_6, %c0_7] : memref<128x32xbf16, #tpu.memory_space<vmem>>, vector<128x32xbf16>
    %cst_8 = arith.constant dense<0.000000e+00> : vector<16x32xf32>
    %10 = tpu.matmul %8, %9, %cst_8 {dimension_numbers = #tpu.dot_dimension_numbers<[1], [0], [0], [1], [0, 0, 1, 1], [], []>} : vector<16x128xbf16>, vector<128x32xbf16>, vector<16x32xf32> -> vector<16x32xf32>
    %c0_9 = arith.constant 0 : index
    %c0_10 = arith.constant 0 : index
    %11 = vector.load %arg6[%c0_9, %c0_10] : memref<1x32xf32, #tpu.memory_space<vmem>>, vector<1x32xf32>
    %12 = vector.broadcast %11 : vector<1x32xf32> to vector<16x32xf32>
    %13 = arith.addf %10, %12 : vector<16x32xf32>
    %14 = vector.extract_strided_slice %13 {offsets = [0, 0], sizes = [16, 16], strides = [1, 1]} : vector<16x32xf32> to vector<16x16xf32>
    %15 = vector.extract_strided_slice %13 {offsets = [0, 16], sizes = [16, 16], strides = [1, 1]} : vector<16x32xf32> to vector<16x16xf32>
    %c0_11 = arith.constant 0 : index
    %c0_12 = arith.constant 0 : index
    %16 = vector.load %arg2[%c0_11, %c0_12] : memref<16x16xf32, #tpu.memory_space<vmem>>, vector<16x16xf32>
    %17 = arith.mulf %16, %15 : vector<16x16xf32>
    %18 = arith.addf %14, %17 : vector<16x16xf32>
    %19 = arith.truncf %18 : vector<16x16xf32> to vector<16x16xbf16>
    %c0_13 = arith.constant 0 : index
    %c0_14 = arith.constant 0 : index
    %20 = vector.load %arg7[%c0_13, %c0_14] : memref<16x128xbf16, #tpu.memory_space<vmem>>, vector<16x128xbf16>
    %cst_15 = arith.constant dense<0.000000e+00> : vector<16x128xf32>
    %21 = tpu.matmul %19, %20, %cst_15 {dimension_numbers = #tpu.dot_dimension_numbers<[1], [0], [0], [1], [0, 0, 1, 1], [], []>} : vector<16x16xbf16>, vector<16x128xbf16>, vector<16x128xf32> -> vector<16x128xf32>
    %c0_16 = arith.constant 0 : index
    %c0_17 = arith.constant 0 : index
    %22 = vector.load %arg8[%c0_16, %c0_17] : memref<1x128xf32, #tpu.memory_space<vmem>>, vector<1x128xf32>
    %23 = vector.broadcast %22 : vector<1x128xf32> to vector<16x128xf32>
    %24 = arith.addf %21, %23 : vector<16x128xf32>
    %cst_18 = arith.constant 0.000000e+00 : f32
    %25 = vector.broadcast %cst_18 : f32 to vector<16x128xf32>
    %26 = arith.maximumf %24, %25 : vector<16x128xf32>
    %27 = arith.truncf %26 : vector<16x128xf32> to vector<16x128xbf16>
    %c0_19 = arith.constant 0 : index
    %c0_20 = arith.constant 0 : index
    %28 = vector.load %arg9[%c0_19, %c0_20] : memref<128x896xbf16, #tpu.memory_space<vmem>>, vector<128x896xbf16>
    %cst_21 = arith.constant dense<0.000000e+00> : vector<16x896xf32>
    %29 = tpu.matmul %27, %28, %cst_21 {dimension_numbers = #tpu.dot_dimension_numbers<[1], [0], [0], [1], [0, 0, 1, 1], [], []>} : vector<16x128xbf16>, vector<128x896xbf16>, vector<16x896xf32> -> vector<16x896xf32>
    %c0_22 = arith.constant 0 : index
    %c0_23 = arith.constant 0 : index
    %30 = vector.load %arg10[%c0_22, %c0_23] : memref<1x896xf32, #tpu.memory_space<vmem>>, vector<1x896xf32>
    %31 = vector.broadcast %30 : vector<1x896xf32> to vector<16x896xf32>
    %32 = arith.addf %29, %31 : vector<16x896xf32>
    %33 = arith.negf %32 : vector<16x896xf32>
    %34 = math.exp %33 : vector<16x896xf32>
    %cst_24 = arith.constant 1.000000e+00 : f32
    %35 = vector.broadcast %cst_24 : f32 to vector<16x896xf32>
    %36 = arith.addf %35, %34 : vector<16x896xf32>
    %37 = arith.divf %35, %36 : vector<16x896xf32>
    %c0_25 = arith.constant 0 : index
    %c0_26 = arith.constant 0 : index
    %38 = vector.load %arg11[%c0_25, %c0_26] : memref<16x896xf32, #tpu.memory_space<vmem>>, vector<16x896xf32>
    tpu.vector_store %arg11[%c0_25, %c0_26], %37 {strides = array<i32>} : memref<16x896xf32, #tpu.memory_space<vmem>>, vector<16x896xf32>,
    %c0_27 = arith.constant 0 : index
    %c0_28 = arith.constant 0 : index
    %39 = vector.load %arg12[%c0_27, %c0_28] : memref<16x32xf32, #tpu.memory_space<vmem>>, vector<16x32xf32>
    tpu.vector_store %arg12[%c0_27, %c0_28], %13 {strides = array<i32>} : memref<16x32xf32, #tpu.memory_space<vmem>>, vector<16x32xf32>,
    return
  }
  func.func @transform_0(%arg0: i32) -> (i32, i32) {
    %c0_i32 = arith.constant 0 : i32
    %c0_i32_0 = arith.constant 0 : i32
    return %arg0, %c0_i32 : i32, i32
  }
  func.func @transform_1(%arg0: i32) -> (i32, i32) {
    %c0_i32 = arith.constant 0 : i32
    %c0_i32_0 = arith.constant 0 : i32
    return %arg0, %c0_i32 : i32, i32
  }
  func.func @transform_2(%arg0: i32) -> (i32, i32) {
    %c0_i32 = arith.constant 0 : i32
    %c0_i32_0 = arith.constant 0 : i32
    %c0_i32_1 = arith.constant 0 : i32
    return %c0_i32, %c0_i32_0 : i32, i32
  }
  func.func @transform_3(%arg0: i32) -> (i32, i32) {
    %c0_i32 = arith.constant 0 : i32
    %c0_i32_0 = arith.constant 0 : i32
    %c0_i32_1 = arith.constant 0 : i32
    return %c0_i32, %c0_i32_0 : i32, i32
  }
  func.func @transform_4(%arg0: i32) -> (i32, i32) {
    %c0_i32 = arith.constant 0 : i32
    %c0_i32_0 = arith.constant 0 : i32
    %c0_i32_1 = arith.constant 0 : i32
    return %c0_i32, %c0_i32_0 : i32, i32
  }
  func.func @transform_5(%arg0: i32) -> (i32, i32) {
    %c0_i32 = arith.constant 0 : i32
    %c0_i32_0 = arith.constant 0 : i32
    %c0_i32_1 = arith.constant 0 : i32
    return %c0_i32, %c0_i32_0 : i32, i32
  }
  func.func @transform_6(%arg0: i32) -> (i32, i32) {
    %c0_i32 = arith.constant 0 : i32
    %c0_i32_0 = arith.constant 0 : i32
    %c0_i32_1 = arith.constant 0 : i32
    return %c0_i32, %c0_i32_0 : i32, i32
  }
  func.func @transform_7(%arg0: i32) -> (i32, i32) {
    %c0_i32 = arith.constant 0 : i32
    %c0_i32_0 = arith.constant 0 : i32
    %c0_i32_1 = arith.constant 0 : i32
    return %c0_i32, %c0_i32_0 : i32, i32
  }
  func.func @transform_8(%arg0: i32) -> (i32, i32) {
    %c0_i32 = arith.constant 0 : i32
    %c0_i32_0 = arith.constant 0 : i32
    %c0_i32_1 = arith.constant 0 : i32
    return %c0_i32, %c0_i32_0 : i32, i32
  }
  func.func @transform_9(%arg0: i32) -> (i32, i32) {
    %c0_i32 = arith.constant 0 : i32
    %c0_i32_0 = arith.constant 0 : i32
    %c0_i32_1 = arith.constant 0 : i32
    return %c0_i32, %c0_i32_0 : i32, i32
  }
  func.func @transform_10(%arg0: i32) -> (i32, i32) {
    %c0_i32 = arith.constant 0 : i32
    %c0_i32_0 = arith.constant 0 : i32
    return %arg0, %c0_i32 : i32, i32
  }
  func.func @transform_11(%arg0: i32) -> (i32, i32) {
    %c0_i32 = arith.constant 0 : i32
    %c0_i32_0 = arith.constant 0 : i32
    return %arg0, %c0_i32 : i32, i32
  }
}

</mosaic_0001>

<llo_original>
// kernel: vae_forward.1
$region0: #{vae_forward.1}
  #allocation0 [shape = 'u32[]', space=smem, size = 0x4, offset = 0x4, fixed_abs, tag = 'smem constant byte address 0x4 - core index']
  #allocation1 [shape = 'u32[144,128]{1,0:T(1,128)}', space=vmem, size = 0x12000, scoped, tag = 'internal scratch']
  %s0 = inlined_call_operand.vmem [shape: bf16[16,896], index: 0, kind: input, shape index: {}]
  %s1 = inlined_call_operand.vmem [shape: f32[16,16], index: 1, kind: input, shape index: {}]
  %s2 = inlined_call_operand.hbm [shape: bf16[896,128], index: 2, kind: input, shape index: {}]
  %s3 = inlined_call_operand.vmem [shape: f32[1,128], index: 3, kind: input, shape index: {}]
  %s4 = inlined_call_operand.vmem [shape: bf16[128,32], index: 4, kind: input, shape index: {}]
  %s5 = inlined_call_operand.vmem [shape: f32[1,32], index: 5, kind: input, shape index: {}]
  %s6 = inlined_call_operand.vmem [shape: bf16[16,128], index: 6, kind: input, shape index: {}]
  %s7 = inlined_call_operand.vmem [shape: f32[1,128], index: 7, kind: input, shape index: {}]
  %s8 = inlined_call_operand.hbm [shape: bf16[128,896], index: 8, kind: input, shape index: {}]
  %s9 = inlined_call_operand.vmem [shape: f32[1,896], index: 9, kind: input, shape index: {}]
  %s10 = inlined_call_operand.vmem [shape: f32[16,896], index: 10, kind: output, shape index: {0}]
  %s11 = inlined_call_operand.vmem [shape: f32[16,32], index: 11, kind: output, shape index: {1}]
  %12 = xla_tuple %s10, %s11
  %s13 = sld [smem:[#allocation0]]
  $region66: #{vae_forward.1} parent=0
    _
  %s15 = ssub.s32 1, %s13
  %s16 = scalar_select 0, %s15, %s13
  $region1: #{vae_forward.1} parent=0
    #allocation2 [shape = 'u8[229376]{0}', space=vmem, size = 0x38000, scoped, tag = 'input window, operand 2, single buffered']
    #allocation3 [shape = 's32[1]{0}', space=sflag, size = 0x4, scoped, tag = 'scoped memory for vae_forward.1']
    #allocation4 [shape = 'u8[229376]{0}', space=vmem, size = 0x38000, scoped, tag = 'input window, operand 8, single buffered']
    #allocation5 [shape = 's32[1]{0}', space=sflag, size = 0x4, scoped, tag = 'scoped memory for vae_forward.1']
    %17 = vsyncpa [#allocation3], 0
    %18 = vsyncpa [#allocation5], 0
    // Predicated region
    $region2: #{vae_forward.1} parent=1 // pred_check
      _
    $region3: #{vae_forward.1} parent=1 // pred_check_branch
      %20 = sbr.rel (0) target = $region5
    $region4: #{vae_forward.1} parent=1 // pred_region
      _
    $region5: #{vae_forward.1} parent=1 // pred_fallthru
      _
    // Predicated region
    $region6: #{vae_forward.1} parent=1 // pred_check
      _
    $region7: #{vae_forward.1} parent=1 // pred_check_branch
      %22 = sbr.rel (0) target = $region9
    $region8: #{vae_forward.1} parent=1 // pred_region
      _
    $region9: #{vae_forward.1} parent=1 // pred_fallthru
      _
    // Predicated region
    $region10: #{vae_forward.1} parent=1 // pred_check
      _
    $region11: #{vae_forward.1} parent=1 // pred_check_branch
      %24 = sbr.rel (0) target = $region13
    $region12: #{vae_forward.1} parent=1 // pred_region
      %s26 = ssub.s32 7168, 7168
      %27 = vsyncadd [#allocation3], %s26
      %s28 = sshll.u32 [#allocation2], 4
      %s29 = int_to_ptr.vmem [resolvable:$true] %s28
      %34 = dma.hbm_to_vmem [thread:$0]  %s2, 7168, %s29, [#allocation3], 64, 64, 4
    $region13: #{vae_forward.1} parent=1 // pred_fallthru
      _
    // Predicated region
    $region14: #{vae_forward.1} parent=1 // pred_check
      _
    $region15: #{vae_forward.1} parent=1 // pred_check_branch
      %36 = sbr.rel (0) target = $region17
    $region16: #{vae_forward.1} parent=1 // pred_region
      _
    $region17: #{vae_forward.1} parent=1 // pred_fallthru
      _
    // Predicated region
    $region18: #{vae_forward.1} parent=1 // pred_check
      _
    $region19: #{vae_forward.1} parent=1 // pred_check_branch
      %38 = sbr.rel (0) target = $region21
    $region20: #{vae_forward.1} parent=1 // pred_region
      _
    $region21: #{vae_forward.1} parent=1 // pred_fallthru
      _
    // Predicated region
    $region22: #{vae_forward.1} parent=1 // pred_check
      _
    $region23: #{vae_forward.1} parent=1 // pred_check_branch
      %40 = sbr.rel (0) target = $region25
    $region24: #{vae_forward.1} parent=1 // pred_region
      _
    $region25: #{vae_forward.1} parent=1 // pred_fallthru
      _
    // Predicated region
    $region26: #{vae_forward.1} parent=1 // pred_check
      _
    $region27: #{vae_forward.1} parent=1 // pred_check_branch
      %42 = sbr.rel (0) target = $region29
    $region28: #{vae_forward.1} parent=1 // pred_region
      _
    $region29: #{vae_forward.1} parent=1 // pred_fallthru
      _
    // Predicated region
    $region30: #{vae_forward.1} parent=1 // pred_check
      _
    $region31: #{vae_forward.1} parent=1 // pred_check_branch
      %44 = sbr.rel (0) target = $region33
    $region32: #{vae_forward.1} parent=1 // pred_region
      _
    $region33: #{vae_forward.1} parent=1 // pred_fallthru
      _
    // Predicated region
    $region34: #{vae_forward.1} parent=1 // pred_check
      _
    $region35: #{vae_forward.1} parent=1 // pred_check_branch
      %46 = sbr.rel (0) target = $region37
    $region36: #{vae_forward.1} parent=1 // pred_region
      %s48 = ssub.s32 7168, 7168
      %49 = vsyncadd [#allocation5], %s48
      %s50 = sshll.u32 [#allocation4], 4
      %s51 = int_to_ptr.vmem [resolvable:$true] %s50
      %56 = dma.hbm_to_vmem [thread:$0]  %s8, 7168, %s51, [#allocation5], 448, 448, 28
    $region37: #{vae_forward.1} parent=1 // pred_fallthru
      _
    // Predicated region
    $region38: #{vae_forward.1} parent=1 // pred_check
      _
    $region39: #{vae_forward.1} parent=1 // pred_check_branch
      %58 = sbr.rel (0) target = $region41
    $region40: #{vae_forward.1} parent=1 // pred_region
      _
    $region41: #{vae_forward.1} parent=1 // pred_fallthru
      _
    // Predicated region
    $region42: #{vae_forward.1} parent=1 // pred_check
      _
    $region43: #{vae_forward.1} parent=1 // pred_check_branch
      %60 = sbr.rel (0) target = $region45
    $region44: #{vae_forward.1} parent=1 // pred_region
      %61 = dma.done [#allocation3], 7168
    $region45: #{vae_forward.1} parent=1 // pred_fallthru
      _
    // Predicated region
    $region46: #{vae_forward.1} parent=1 // pred_check
      _
    $region47: #{vae_forward.1} parent=1 // pred_check_branch
      %63 = sbr.rel (0) target = $region49
    $region48: #{vae_forward.1} parent=1 // pred_region
      %64 = dma.done [#allocation5], 7168
    $region49: #{vae_forward.1} parent=1 // pred_fallthru
      _
    %v66 = vld [vmem:[%s0] sm:$0xff]
    %v67 = vld [vmem:[%s0 + $0x8] sm:$0xff]
    %v68 = vld [vmem:[%s0 + $0x10] sm:$0xff]
    %v69 = vld [vmem:[%s0 + $0x18] sm:$0xf]
    %v70 = vld [vmem:[%s0 + $0x1c] sm:$0xff]
    %v71 = vld [vmem:[%s0 + $0x24] sm:$0xff]
    %v72 = vld [vmem:[%s0 + $0x2c] sm:$0xff]
    %v73 = vld [vmem:[%s0 + $0x34] sm:$0xf]
    %v74 = vld [vmem:[#allocation2] sm:$0xf]
    %v75 = vld [vmem:[#allocation2 + $0x4] sm:$0xf]
    %v76 = vld [vmem:[#allocation2 + $0x8] sm:$0xf]
    %v77 = vld [vmem:[#allocation2 + $0xc] sm:$0xf]
    %v78 = vld [vmem:[#allocation2 + $0x10] sm:$0xf]
    %v79 = vld [vmem:[#allocation2 + $0x14] sm:$0xf]
    %v80 = vld [vmem:[#allocation2 + $0x18] sm:$0xf]
    %v81 = vld [vmem:[#allocation2 + $0x1c] sm:$0xf]
    %v82 = vld [vmem:[#allocation2 + $0x20] sm:$0xf]
    %v83 = vld [vmem:[#allocation2 + $0x24] sm:$0xf]
    %v84 = vld [vmem:[#allocation2 + $0x28] sm:$0xf]
    %v85 = vld [vmem:[#allocation2 + $0x2c] sm:$0xf]
    %v86 = vld [vmem:[#allocation2 + $0x30] sm:$0xf]
    %v87 = vld [vmem:[#allocation2 + $0x34] sm:$0xf]
    %v88 = vld [vmem:[#allocation2 + $0x38] sm:$0xf]
    %v89 = vld [vmem:[#allocation2 + $0x3c] sm:$0xf]
    %v90 = vld [vmem:[#allocation2 + $0x40] sm:$0xf]
    %v91 = vld [vmem:[#allocation2 + $0x44] sm:$0xf]
    %v92 = vld [vmem:[#allocation2 + $0x48] sm:$0xf]
    %v93 = vld [vmem:[#allocation2 + $0x4c] sm:$0xf]
    %v94 = vld [vmem:[#allocation2 + $0x50] sm:$0xf]
    %v95 = vld [vmem:[#allocation2 + $0x54] sm:$0xf]
    %v96 = vld [vmem:[#allocation2 + $0x58] sm:$0xf]
    %v97 = vld [vmem:[#allocation2 + $0x5c] sm:$0xf]
    %v98 = vld [vmem:[#allocation2 + $0x60] sm:$0xf]
    %v99 = vld [vmem:[#allocation2 + $0x64] sm:$0xf]
    %v100 = vld [vmem:[#allocation2 + $0x68] sm:$0xf]
    %v101 = vld [vmem:[#allocation2 + $0x6c] sm:$0xf]
    %v102 = vld [vmem:[#allocation2 + $0x70] sm:$0xf]
    %v103 = vld [vmem:[#allocation2 + $0x74] sm:$0xf]
    %v104 = vld [vmem:[#allocation2 + $0x78] sm:$0xf]
    %v105 = vld [vmem:[#allocation2 + $0x7c] sm:$0xf]
    %v106 = vld [vmem:[#allocation2 + $0x80] sm:$0xf]
    %v107 = vld [vmem:[#allocation2 + $0x84] sm:$0xf]
    %v108 = vld [vmem:[#allocation2 + $0x88] sm:$0xf]
    %v109 = vld [vmem:[#allocation2 + $0x8c] sm:$0xf]
    %v110 = vld [vmem:[#allocation2 + $0x90] sm:$0xf]
    %v111 = vld [vmem:[#allocation2 + $0x94] sm:$0xf]
    %v112 = vld [vmem:[#allocation2 + $0x98] sm:$0xf]
    %v113 = vld [vmem:[#allocation2 + $0x9c] sm:$0xf]
    %v114 = vld [vmem:[#allocation2 + $0xa0] sm:$0xf]
    %v115 = vld [vmem:[#allocation2 + $0xa4] sm:$0xf]
    %v116 = vld [vmem:[#allocation2 + $0xa8] sm:$0xf]
    %v117 = vld [vmem:[#allocation2 + $0xac] sm:$0xf]
    %v118 = vld [vmem:[#allocation2 + $0xb0] sm:$0xf]
    %v119 = vld [vmem:[#allocation2 + $0xb4] sm:$0xf]
    %v120 = vld [vmem:[#allocation2 + $0xb8] sm:$0xf]
    %v121 = vld [vmem:[#allocation2 + $0xbc] sm:$0xf]
    %v122 = vld [vmem:[#allocation2 + $0xc0] sm:$0xf]
    %v123 = vld [vmem:[#allocation2 + $0xc4] sm:$0xf]
    %v124 = vld [vmem:[#allocation2 + $0xc8] sm:$0xf]
    %v125 = vld [vmem:[#allocation2 + $0xcc] sm:$0xf]
    %v126 = vld [vmem:[#allocation2 + $0xd0] sm:$0xf]
    %v127 = vld [vmem:[#allocation2 + $0xd4] sm:$0xf]
    %v128 = vld [vmem:[#allocation2 + $0xd8] sm:$0xf]
    %v129 = vld [vmem:[#allocation2 + $0xdc] sm:$0xf]
    %v130 = vld [vmem:[#allocation2 + $0xe0] sm:$0xf]
    %v131 = vld [vmem:[#allocation2 + $0xe4] sm:$0xf]
    %v132 = vld [vmem:[#allocation2 + $0xe8] sm:$0xf]
    %v133 = vld [vmem:[#allocation2 + $0xec] sm:$0xf]
    %v134 = vld [vmem:[#allocation2 + $0xf0] sm:$0xf]
    %v135 = vld [vmem:[#allocation2 + $0xf4] sm:$0xf]
    %v136 = vld [vmem:[#allocation2 + $0xf8] sm:$0xf]
    %v137 = vld [vmem:[#allocation2 + $0xfc] sm:$0xf]
    %v138 = vld [vmem:[#allocation2 + $0x100] sm:$0xf]
    %v139 = vld [vmem:[#allocation2 + $0x104] sm:$0xf]
    %v140 = vld [vmem:[#allocation2 + $0x108] sm:$0xf]
    %v141 = vld [vmem:[#allocation2 + $0x10c] sm:$0xf]
    %v142 = vld [vmem:[#allocation2 + $0x110] sm:$0xf]
    %v143 = vld [vmem:[#allocation2 + $0x114] sm:$0xf]
    %v144 = vld [vmem:[#allocation2 + $0x118] sm:$0xf]
    %v145 = vld [vmem:[#allocation2 + $0x11c] sm:$0xf]
    %v146 = vld [vmem:[#allocation2 + $0x120] sm:$0xf]
    %v147 = vld [vmem:[#allocation2 + $0x124] sm:$0xf]
    %v148 = vld [vmem:[#allocation2 + $0x128] sm:$0xf]
    %v149 = vld [vmem:[#allocation2 + $0x12c] sm:$0xf]
    %v150 = vld [vmem:[#allocation2 + $0x130] sm:$0xf]
    %v151 = vld [vmem:[#allocation2 + $0x134] sm:$0xf]
    %v152 = vld [vmem:[#allocation2 + $0x138] sm:$0xf]
    %v153 = vld [vmem:[#allocation2 + $0x13c] sm:$0xf]
    %v154 = vld [vmem:[#allocation2 + $0x140] sm:$0xf]
    %v155 = vld [vmem:[#allocation2 + $0x144] sm:$0xf]
    %v156 = vld [vmem:[#allocation2 + $0x148] sm:$0xf]
    %v157 = vld [vmem:[#allocation2 + $0x14c] sm:$0xf]
    %v158 = vld [vmem:[#allocation2 + $0x150] sm:$0xf]
    %v159 = vld [vmem:[#allocation2 + $0x154] sm:$0xf]
    %v160 = vld [vmem:[#allocation2 + $0x158] sm:$0xf]
    %v161 = vld [vmem:[#allocation2 + $0x15c] sm:$0xf]
    %v162 = vld [vmem:[#allocation2 + $0x160] sm:$0xf]
    %v163 = vld [vmem:[#allocation2 + $0x164] sm:$0xf]
    %v164 = vld [vmem:[#allocation2 + $0x168] sm:$0xf]
    %v165 = vld [vmem:[#allocation2 + $0x16c] sm:$0xf]
    %v166 = vld [vmem:[#allocation2 + $0x170] sm:$0xf]
    %v167 = vld [vmem:[#allocation2 + $0x174] sm:$0xf]
    %v168 = vld [vmem:[#allocation2 + $0x178] sm:$0xf]
    %v169 = vld [vmem:[#allocation2 + $0x17c] sm:$0xf]
    %v170 = vld [vmem:[#allocation2 + $0x180] sm:$0xf]
    %v171 = vld [vmem:[#allocation2 + $0x184] sm:$0xf]
    %v172 = vld [vmem:[#allocation2 + $0x188] sm:$0xf]
    %v173 = vld [vmem:[#allocation2 + $0x18c] sm:$0xf]
    %v174 = vld [vmem:[#allocation2 + $0x190] sm:$0xf]
    %v175 = vld [vmem:[#allocation2 + $0x194] sm:$0xf]
    %v176 = vld [vmem:[#allocation2 + $0x198] sm:$0xf]
    %v177 = vld [vmem:[#allocation2 + $0x19c] sm:$0xf]
    %v178 = vld [vmem:[#allocation2 + $0x1a0] sm:$0xf]
    %v179 = vld [vmem:[#allocation2 + $0x1a4] sm:$0xf]
    %v180 = vld [vmem:[#allocation2 + $0x1a8] sm:$0xf]
    %v181 = vld [vmem:[#allocation2 + $0x1ac] sm:$0xf]
    %v182 = vld [vmem:[#allocation2 + $0x1b0] sm:$0xf]
    %v183 = vld [vmem:[#allocation2 + $0x1b4] sm:$0xf]
    %v184 = vld [vmem:[#allocation2 + $0x1b8] sm:$0xf]
    %v185 = vld [vmem:[#allocation2 + $0x1bc] sm:$0xf]
    %v186 = vld [vmem:[%s3] sm:$0x1]
    %v188 = vlaneseq
    %v189 = vshrl.u32 %v188, 7
    %v190 = vsub.s32 0, %v189
    %v191 = vrot.slane %v186, %v190
    %v201 = vunpack.c.l.b16 %v66
    %v202 = vunpack.c.h.b16 %v66
    %v203 = vunpack.c.l.b16 %v67
    %v204 = vunpack.c.h.b16 %v67
    %v205 = vunpack.c.l.b16 %v68
    %v206 = vunpack.c.h.b16 %v68
    %v207 = vunpack.c.l.b16 %v69
    %v208 = vunpack.c.l.b16 %v70
    %v209 = vunpack.c.h.b16 %v70
    %v210 = vunpack.c.l.b16 %v71
    %v211 = vunpack.c.h.b16 %v71
    %v212 = vunpack.c.l.b16 %v72
    %v213 = vunpack.c.h.b16 %v72
    %v214 = vunpack.c.l.b16 %v73
    %v215 = vpack.c.b16 %v208, %v201
    %v216 = vpack.c.b16 %v209, %v202
    %v217 = vpack.c.b16 %v210, %v203
    %v218 = vpack.c.b16 %v211, %v204
    %v219 = vpack.c.b16 %v212, %v205
    %v220 = vpack.c.b16 %v213, %v206
    %v221 = vpack.c.b16 %v214, %v207
    %v341 = vunpack.c.l.b16 %v74
    %v342 = vunpack.c.l.b16 %v75
    %v343 = vunpack.c.l.b16 %v76
    %v344 = vunpack.c.l.b16 %v77
    %v345 = vunpack.c.l.b16 %v78
    %v346 = vunpack.c.l.b16 %v79
    %v347 = vunpack.c.l.b16 %v80
    %v348 = vunpack.c.l.b16 %v81
    %v349 = vunpack.c.l.b16 %v82
    %v350 = vunpack.c.l.b16 %v83
    %v351 = vunpack.c.l.b16 %v84
    %v352 = vunpack.c.l.b16 %v85
    %v353 = vunpack.c.l.b16 %v86
    %v354 = vunpack.c.l.b16 %v87
    %v355 = vunpack.c.l.b16 %v88
    %v356 = vunpack.c.l.b16 %v89
    %v357 = vunpack.c.l.b16 %v90
    %v358 = vunpack.c.l.b16 %v91
    %v359 = vunpack.c.l.b16 %v92
    %v360 = vunpack.c.l.b16 %v93
    %v361 = vunpack.c.l.b16 %v94
    %v362 = vunpack.c.l.b16 %v95
    %v363 = vunpack.c.l.b16 %v96
    %v364 = vunpack.c.l.b16 %v97
    %v365 = vunpack.c.l.b16 %v98
    %v366 = vunpack.c.l.b16 %v99
    %v367 = vunpack.c.l.b16 %v100
    %v368 = vunpack.c.l.b16 %v101
    %v369 = vunpack.c.l.b16 %v102
    %v370 = vunpack.c.l.b16 %v103
    %v371 = vunpack.c.l.b16 %v104
    %v372 = vunpack.c.l.b16 %v105
    %v373 = vunpack.c.l.b16 %v106
    %v374 = vunpack.c.l.b16 %v107
    %v375 = vunpack.c.l.b16 %v108
    %v376 = vunpack.c.l.b16 %v109
    %v377 = vunpack.c.l.b16 %v110
    %v378 = vunpack.c.l.b16 %v111
    %v379 = vunpack.c.l.b16 %v112
    %v380 = vunpack.c.l.b16 %v113
    %v381 = vunpack.c.l.b16 %v114
    %v382 = vunpack.c.l.b16 %v115
    %v383 = vunpack.c.l.b16 %v116
    %v384 = vunpack.c.l.b16 %v117
    %v385 = vunpack.c.l.b16 %v118
    %v386 = vunpack.c.l.b16 %v119
    %v387 = vunpack.c.l.b16 %v120
    %v388 = vunpack.c.l.b16 %v121
    %v389 = vunpack.c.l.b16 %v122
    %v390 = vunpack.c.l.b16 %v123
    %v391 = vunpack.c.l.b16 %v124
    %v392 = vunpack.c.l.b16 %v125
    %v393 = vunpack.c.l.b16 %v126
    %v394 = vunpack.c.l.b16 %v127
    %v395 = vunpack.c.l.b16 %v128
    %v396 = vunpack.c.l.b16 %v129
    %v397 = vunpack.c.l.b16 %v130
    %v398 = vunpack.c.l.b16 %v131
    %v399 = vunpack.c.l.b16 %v132
    %v400 = vunpack.c.l.b16 %v133
    %v401 = vunpack.c.l.b16 %v134
    %v402 = vunpack.c.l.b16 %v135
    %v403 = vunpack.c.l.b16 %v136
    %v404 = vunpack.c.l.b16 %v137
    %v405 = vunpack.c.l.b16 %v138
    %v406 = vunpack.c.l.b16 %v139
    %v407 = vunpack.c.l.b16 %v140
    %v408 = vunpack.c.l.b16 %v141
    %v409 = vunpack.c.l.b16 %v142
    %v410 = vunpack.c.l.b16 %v143
    %v411 = vunpack.c.l.b16 %v144
    %v412 = vunpack.c.l.b16 %v145
    %v413 = vunpack.c.l.b16 %v146
    %v414 = vunpack.c.l.b16 %v147
    %v415 = vunpack.c.l.b16 %v148
    %v416 = vunpack.c.l.b16 %v149
    %v417 = vunpack.c.l.b16 %v150
    %v418 = vunpack.c.l.b16 %v151
    %v419 = vunpack.c.l.b16 %v152
    %v420 = vunpack.c.l.b16 %v153
    %v421 = vunpack.c.l.b16 %v154
    %v422 = vunpack.c.l.b16 %v155
    %v423 = vunpack.c.l.b16 %v156
    %v424 = vunpack.c.l.b16 %v157
    %v425 = vunpack.c.l.b16 %v158
    %v426 = vunpack.c.l.b16 %v159
    %v427 = vunpack.c.l.b16 %v160
    %v428 = vunpack.c.l.b16 %v161
    %v429 = vunpack.c.l.b16 %v162
    %v430 = vunpack.c.l.b16 %v163
    %v431 = vunpack.c.l.b16 %v164
    %v432 = vunpack.c.l.b16 %v165
    %v433 = vunpack.c.l.b16 %v166
    %v434 = vunpack.c.l.b16 %v167
    %v435 = vunpack.c.l.b16 %v168
    %v436 = vunpack.c.l.b16 %v169
    %v437 = vunpack.c.l.b16 %v170
    %v438 = vunpack.c.l.b16 %v171
    %v439 = vunpack.c.l.b16 %v172
    %v440 = vunpack.c.l.b16 %v173
    %v441 = vunpack.c.l.b16 %v174
    %v442 = vunpack.c.l.b16 %v175
    %v443 = vunpack.c.l.b16 %v176
    %v444 = vunpack.c.l.b16 %v177
    %v445 = vunpack.c.l.b16 %v178
    %v446 = vunpack.c.l.b16 %v179
    %v447 = vunpack.c.l.b16 %v180
    %v448 = vunpack.c.l.b16 %v181
    %v449 = vunpack.c.l.b16 %v182
    %v450 = vunpack.c.l.b16 %v183
    %v451 = vunpack.c.l.b16 %v184
    %v452 = vunpack.c.l.b16 %v185
    %v453 = vpack.c.b16 %v342, %v341
    %v454 = vpack.c.b16 %v344, %v343
    %v455 = vpack.c.b16 %v346, %v345
    %v456 = vpack.c.b16 %v348, %v347
    %v457 = vpack.c.b16 %v350, %v349
    %v458 = vpack.c.b16 %v352, %v351
    %v459 = vpack.c.b16 %v354, %v353
    %v460 = vpack.c.b16 %v356, %v355
    %v461 = vpack.c.b16 %v358, %v357
    %v462 = vpack.c.b16 %v360, %v359
    %v463 = vpack.c.b16 %v362, %v361
    %v464 = vpack.c.b16 %v364, %v363
    %v465 = vpack.c.b16 %v366, %v365
    %v466 = vpack.c.b16 %v368, %v367
    %v467 = vpack.c.b16 %v370, %v369
    %v468 = vpack.c.b16 %v372, %v371
    %v469 = vpack.c.b16 %v374, %v373
    %v470 = vpack.c.b16 %v376, %v375
    %v471 = vpack.c.b16 %v378, %v377
    %v472 = vpack.c.b16 %v380, %v379
    %v473 = vpack.c.b16 %v382, %v381
    %v474 = vpack.c.b16 %v384, %v383
    %v475 = vpack.c.b16 %v386, %v385
    %v476 = vpack.c.b16 %v388, %v387
    %v477 = vpack.c.b16 %v390, %v389
    %v478 = vpack.c.b16 %v392, %v391
    %v479 = vpack.c.b16 %v394, %v393
    %v480 = vpack.c.b16 %v396, %v395
    %v481 = vpack.c.b16 %v398, %v397
    %v482 = vpack.c.b16 %v400, %v399
    %v483 = vpack.c.b16 %v402, %v401
    %v484 = vpack.c.b16 %v404, %v403
    %v485 = vpack.c.b16 %v406, %v405
    %v486 = vpack.c.b16 %v408, %v407
    %v487 = vpack.c.b16 %v410, %v409
    %v488 = vpack.c.b16 %v412, %v411
    %v489 = vpack.c.b16 %v414, %v413
    %v490 = vpack.c.b16 %v416, %v415
    %v491 = vpack.c.b16 %v418, %v417
    %v492 = vpack.c.b16 %v420, %v419
    %v493 = vpack.c.b16 %v422, %v421
    %v494 = vpack.c.b16 %v424, %v423
    %v495 = vpack.c.b16 %v426, %v425
    %v496 = vpack.c.b16 %v428, %v427
    %v497 = vpack.c.b16 %v430, %v429
    %v498 = vpack.c.b16 %v432, %v431
    %v499 = vpack.c.b16 %v434, %v433
    %v500 = vpack.c.b16 %v436, %v435
    %v501 = vpack.c.b16 %v438, %v437
    %v502 = vpack.c.b16 %v440, %v439
    %v503 = vpack.c.b16 %v442, %v441
    %v504 = vpack.c.b16 %v444, %v443
    %v505 = vpack.c.b16 %v446, %v445
    %v506 = vpack.c.b16 %v448, %v447
    %v507 = vpack.c.b16 %v450, %v449
    %v508 = vpack.c.b16 %v452, %v451
    %565 = vmatprep.subr.bf16.mxu0 0
    %566 = vmatpush1.bf16.msra.mxu0 %v453
    %567 = vmatprep.subr.bf16.mxu0 0
    %568 = vmatpush1.bf16.msra.mxu0 %v454
    %569 = vmatprep.subr.bf16.mxu0 0
    %570 = vmatpush1.bf16.msra.mxu0 %v455
    %571 = vmatprep.subr.bf16.mxu0 0
    %572 = vmatpush1.bf16.msra.mxu0 %v456
    %573 = vmatprep.subr.bf16.mxu0 0
    %574 = vmatpush1.bf16.msra.mxu0 %v457
    %575 = vmatprep.subr.bf16.mxu0 0
    %576 = vmatpush1.bf16.msra.mxu0 %v458
    %577 = vmatprep.subr.bf16.mxu0 0
    %578 = vmatpush1.bf16.msra.mxu0 %v459
    %579 = vmatprep.subr.bf16.mxu0 0
    %580 = vmatpush1.bf16.msra.mxu0 %v460
    %581 = vmatprep.subr.bf16.mxu0 0
    %582 = vmatpush1.bf16.msra.mxu0 %v461
    %583 = vmatprep.subr.bf16.mxu0 0
    %584 = vmatpush1.bf16.msra.mxu0 %v462
    %585 = vmatprep.subr.bf16.mxu0 0
    %586 = vmatpush1.bf16.msra.mxu0 %v463
    %587 = vmatprep.subr.bf16.mxu0 0
    %588 = vmatpush1.bf16.msra.mxu0 %v464
    %589 = vmatprep.subr.bf16.mxu0 0
    %590 = vmatpush1.bf16.msra.mxu0 %v465
    %591 = vmatprep.subr.bf16.mxu0 0
    %592 = vmatpush1.bf16.msra.mxu0 %v466
    %593 = vmatprep.subr.bf16.mxu0 0
    %594 = vmatpush1.bf16.msra.mxu0 %v467
    %595 = vmatprep.subr.bf16.mxu0 0
    %596 = vmatpush1.bf16.msra.mxu0 %v468
    %597 = vmatprep.mubr.bf16.mxu0 %v216
    %598 = vmatmul.mubr.bf16.gmra.mrb[0].mxu0 %v215
    %v599 = vpop.f32.mrb[0].mxu0
    %v600 = vadd.f32 %v191, %v599
    %v601 = vpop.f32.mrb[0].mxu0
    %v602 = vpop.f32.mrb[0].mxu0
    %v603 = vadd.f32 %v191, %v602
    %v604 = vpop.f32.mrb[0].mxu0
    %605 = vdwg.mxu0
    %606 = vmatprep.subr.bf16.mxu0 0
    %607 = vmatpush1.bf16.msra.mxu0 %v469
    %608 = vmatprep.subr.bf16.mxu0 0
    %609 = vmatpush1.bf16.msra.mxu0 %v470
    %610 = vmatprep.subr.bf16.mxu0 0
    %611 = vmatpush1.bf16.msra.mxu0 %v471
    %612 = vmatprep.subr.bf16.mxu0 0
    %613 = vmatpush1.bf16.msra.mxu0 %v472
    %614 = vmatprep.subr.bf16.mxu0 0
    %615 = vmatpush1.bf16.msra.mxu0 %v473
    %616 = vmatprep.subr.bf16.mxu0 0
    %617 = vmatpush1.bf16.msra.mxu0 %v474
    %618 = vmatprep.subr.bf16.mxu0 0
    %619 = vmatpush1.bf16.msra.mxu0 %v475
    %620 = vmatprep.subr.bf16.mxu0 0
    %621 = vmatpush1.bf16.msra.mxu0 %v476
    %622 = vmatprep.subr.bf16.mxu0 0
    %623 = vmatpush1.bf16.msra.mxu0 %v477
    %624 = vmatprep.subr.bf16.mxu0 0
    %625 = vmatpush1.bf16.msra.mxu0 %v478
    %626 = vmatprep.subr.bf16.mxu0 0
    %627 = vmatpush1.bf16.msra.mxu0 %v479
    %628 = vmatprep.subr.bf16.mxu0 0
    %629 = vmatpush1.bf16.msra.mxu0 %v480
    %630 = vmatprep.subr.bf16.mxu0 0
    %631 = vmatpush1.bf16.msra.mxu0 %v481
    %632 = vmatprep.subr.bf16.mxu0 0
    %633 = vmatpush1.bf16.msra.mxu0 %v482
    %634 = vmatprep.subr.bf16.mxu0 0
    %635 = vmatpush1.bf16.msra.mxu0 %v483
    %636 = vmatprep.subr.bf16.mxu0 0
    %637 = vmatpush1.bf16.msra.mxu0 %v484
    %638 = vmatprep.mubr.bf16.mxu0 %v218
    %639 = vmatmul.mubr.bf16.gmra.mrb[0].mxu0 %v217
    %v640 = vpop.f32.mrb[0].mxu0
    %v641 = vadd.f32 %v600, %v640
    %v642 = vpop.f32.mrb[0].mxu0
    %v643 = vpop.f32.mrb[0].mxu0
    %v644 = vadd.f32 %v603, %v643
    %v645 = vpop.f32.mrb[0].mxu0
    %646 = vdwg.mxu0
    %647 = vmatprep.subr.bf16.mxu0 0
    %648 = vmatpush1.bf16.msra.mxu0 %v485
    %649 = vmatprep.subr.bf16.mxu0 0
    %650 = vmatpush1.bf16.msra.mxu0 %v486
    %651 = vmatprep.subr.bf16.mxu0 0
    %652 = vmatpush1.bf16.msra.mxu0 %v487
    %653 = vmatprep.subr.bf16.mxu0 0
    %654 = vmatpush1.bf16.msra.mxu0 %v488
    %655 = vmatprep.subr.bf16.mxu0 0
    %656 = vmatpush1.bf16.msra.mxu0 %v489
    %657 = vmatprep.subr.bf16.mxu0 0
    %658 = vmatpush1.bf16.msra.mxu0 %v490
    %659 = vmatprep.subr.bf16.mxu0 0
    %660 = vmatpush1.bf16.msra.mxu0 %v491
    %661 = vmatprep.subr.bf16.mxu0 0
    %662 = vmatpush1.bf16.msra.mxu0 %v492
    %663 = vmatprep.subr.bf16.mxu0 0
    %664 = vmatpush1.bf16.msra.mxu0 %v493
    %665 = vmatprep.subr.bf16.mxu0 0
    %666 = vmatpush1.bf16.msra.mxu0 %v494
    %667 = vmatprep.subr.bf16.mxu0 0
    %668 = vmatpush1.bf16.msra.mxu0 %v495
    %669 = vmatprep.subr.bf16.mxu0 0
    %670 = vmatpush1.bf16.msra.mxu0 %v496
    %671 = vmatprep.subr.bf16.mxu0 0
    %672 = vmatpush1.bf16.msra.mxu0 %v497
    %673 = vmatprep.subr.bf16.mxu0 0
    %674 = vmatpush1.bf16.msra.mxu0 %v498
    %675 = vmatprep.subr.bf16.mxu0 0
    %676 = vmatpush1.bf16.msra.mxu0 %v499
    %677 = vmatprep.subr.bf16.mxu0 0
    %678 = vmatpush1.bf16.msra.mxu0 %v500
    %679 = vmatprep.mubr.bf16.mxu0 %v220
    %680 = vmatmul.mubr.bf16.gmra.mrb[0].mxu0 %v219
    %v681 = vpop.f32.mrb[0].mxu0
    %v682 = vadd.f32 %v641, %v681
    %v683 = vpop.f32.mrb[0].mxu0
    %v684 = vpop.f32.mrb[0].mxu0
    %v685 = vadd.f32 %v644, %v684
    %v686 = vpop.f32.mrb[0].mxu0
    %687 = vdwg.mxu0
    %688 = vmatprep.subr.bf16.mxu0 0
    %689 = vmatpush1.bf16.msra.mxu0 %v501
    %690 = vmatprep.subr.bf16.mxu0 0
    %691 = vmatpush1.bf16.msra.mxu0 %v502
    %692 = vmatprep.subr.bf16.mxu0 0
    %693 = vmatpush1.bf16.msra.mxu0 %v503
    %694 = vmatprep.subr.bf16.mxu0 0
    %695 = vmatpush1.bf16.msra.mxu0 %v504
    %696 = vmatprep.subr.bf16.mxu0 0
    %697 = vmatpush1.bf16.msra.mxu0 %v505
    %698 = vmatprep.subr.bf16.mxu0 0
    %699 = vmatpush1.bf16.msra.mxu0 %v506
    %700 = vmatprep.subr.bf16.mxu0 0
    %701 = vmatpush1.bf16.msra.mxu0 %v507
    %702 = vmatprep.subr.bf16.mxu0 0
    %703 = vmatpush1.bf16.msra.mxu0 %v508
    %704 = vmatprep.subr.bf16.mxu0 0
    %705 = vmatpush1.bf16.msra.mxu0 0
    %706 = vmatprep.subr.bf16.mxu0 0
    %707 = vmatpush1.bf16.msra.mxu0 0
    %708 = vmatprep.subr.bf16.mxu0 0
    %709 = vmatpush1.bf16.msra.mxu0 0
    %710 = vmatprep.subr.bf16.mxu0 0
    %711 = vmatpush1.bf16.msra.mxu0 0
    %712 = vmatprep.subr.bf16.mxu0 0
    %713 = vmatpush1.bf16.msra.mxu0 0
    %714 = vmatprep.subr.bf16.mxu0 0
    %715 = vmatpush1.bf16.msra.mxu0 0
    %716 = vmatprep.subr.bf16.mxu0 0
    %717 = vmatpush1.bf16.msra.mxu0 0
    %718 = vmatprep.subr.bf16.mxu0 0
    %719 = vmatpush1.bf16.msra.mxu0 0
    %720 = vmatprep.mubr.bf16.mxu0 0
    %721 = vmatmul.mubr.bf16.gmra.mrb[0].mxu0 %v221
    %v722 = vpop.f32.mrb[0].mxu0
    %v723 = vadd.f32 %v682, %v722
    %v724 = vpop.f32.mrb[0].mxu0
    %v725 = vpop.f32.mrb[0].mxu0
    %v726 = vadd.f32 %v685, %v725
    %v727 = vpop.f32.mrb[0].mxu0
    %728 = vdwg.mxu0
    %v729 = vmax.f32 %v723, 0.0
    %v730 = vmax.f32 %v726, 0.0
    %v731 = vpack.c.bf16 %v730, %v729
    %v732 = vld [vmem:[%s4] sm:$0xf]
    %v733 = vld [vmem:[%s4 + $0x4] sm:$0xf]
    %v734 = vld [vmem:[%s4 + $0x8] sm:$0xf]
    %v735 = vld [vmem:[%s4 + $0xc] sm:$0xf]
    %v736 = vld [vmem:[%s4 + $0x10] sm:$0xf]
    %v737 = vld [vmem:[%s4 + $0x14] sm:$0xf]
    %v738 = vld [vmem:[%s4 + $0x18] sm:$0xf]
    %v739 = vld [vmem:[%s4 + $0x1c] sm:$0xf]
    %v740 = vld [vmem:[%s4 + $0x20] sm:$0xf]
    %v741 = vld [vmem:[%s4 + $0x24] sm:$0xf]
    %v742 = vld [vmem:[%s4 + $0x28] sm:$0xf]
    %v743 = vld [vmem:[%s4 + $0x2c] sm:$0xf]
    %v744 = vld [vmem:[%s4 + $0x30] sm:$0xf]
    %v745 = vld [vmem:[%s4 + $0x34] sm:$0xf]
    %v746 = vld [vmem:[%s4 + $0x38] sm:$0xf]
    %v747 = vld [vmem:[%s4 + $0x3c] sm:$0xf]
    %v748 = vld [vmem:[%s5] sm:$0x1]
    %v750 = vlaneseq
    %v751 = vshrl.u32 %v750, 7
    %v752 = vsub.s32 0, %v751
    %v753 = vrot.slane %v748, %v752
    %v771 = vunpack.c.l.b16 %v732
    %v772 = vunpack.c.l.b16 %v733
    %v773 = vunpack.c.l.b16 %v734
    %v774 = vunpack.c.l.b16 %v735
    %v775 = vunpack.c.l.b16 %v736
    %v776 = vunpack.c.l.b16 %v737
    %v777 = vunpack.c.l.b16 %v738
    %v778 = vunpack.c.l.b16 %v739
    %v779 = vunpack.c.l.b16 %v740
    %v780 = vunpack.c.l.b16 %v741
    %v781 = vunpack.c.l.b16 %v742
    %v782 = vunpack.c.l.b16 %v743
    %v783 = vunpack.c.l.b16 %v744
    %v784 = vunpack.c.l.b16 %v745
    %v785 = vunpack.c.l.b16 %v746
    %v786 = vunpack.c.l.b16 %v747
    %v787 = vpack.c.b16 %v772, %v771
    %v788 = vpack.c.b16 %v774, %v773
    %v789 = vpack.c.b16 %v776, %v775
    %v790 = vpack.c.b16 %v778, %v777
    %v791 = vpack.c.b16 %v780, %v779
    %v792 = vpack.c.b16 %v782, %v781
    %v793 = vpack.c.b16 %v784, %v783
    %v794 = vpack.c.b16 %v786, %v785
    %803 = vmatprep.subr.bf16.mxu0 0
    %804 = vmatpush1.bf16.msra.mxu0 %v787
    %805 = vmatprep.subr.bf16.mxu0 0
    %806 = vmatpush1.bf16.msra.mxu0 %v788
    %807 = vmatprep.subr.bf16.mxu0 0
    %808 = vmatpush1.bf16.msra.mxu0 %v789
    %809 = vmatprep.subr.bf16.mxu0 0
    %810 = vmatpush1.bf16.msra.mxu0 %v790
    %811 = vmatprep.subr.bf16.mxu0 0
    %812 = vmatpush1.bf16.msra.mxu0 %v791
    %813 = vmatprep.subr.bf16.mxu0 0
    %814 = vmatpush1.bf16.msra.mxu0 %v792
    %815 = vmatprep.subr.bf16.mxu0 0
    %816 = vmatpush1.bf16.msra.mxu0 %v793
    %817 = vmatprep.subr.bf16.mxu0 0
    %818 = vmatpush1.bf16.msra.mxu0 %v794
    %819 = vmatprep.subr.bf16.mxu0 0
    %820 = vmatpush1.bf16.msra.mxu0 0
    %821 = vmatprep.subr.bf16.mxu0 0
    %822 = vmatpush1.bf16.msra.mxu0 0
    %823 = vmatprep.subr.bf16.mxu0 0
    %824 = vmatpush1.bf16.msra.mxu0 0
    %825 = vmatprep.subr.bf16.mxu0 0
    %826 = vmatpush1.bf16.msra.mxu0 0
    %827 = vmatprep.subr.bf16.mxu0 0
    %828 = vmatpush1.bf16.msra.mxu0 0
    %829 = vmatprep.subr.bf16.mxu0 0
    %830 = vmatpush1.bf16.msra.mxu0 0
    %831 = vmatprep.subr.bf16.mxu0 0
    %832 = vmatpush1.bf16.msra.mxu0 0
    %833 = vmatprep.subr.bf16.mxu0 0
    %834 = vmatpush1.bf16.msra.mxu0 0
    %835 = vmatprep.mubr.bf16.mxu0 0
    %836 = vmatmul.mubr.bf16.gmra.mrb[0].mxu0 %v731
    %v837 = vpop.f32.mrb[0].mxu0
    %v838 = vadd.f32 %v753, %v837
    %v839 = vpop.f32.mrb[0].mxu0
    %v840 = vpop.f32.mrb[0].mxu0
    %v841 = vadd.f32 %v753, %v840
    %v842 = vpop.f32.mrb[0].mxu0
    %843 = vdwg.mxu0
    %v844 = vld [vmem:[%s1] sm:$0xff]
    %v845 = vld [vmem:[%s1 + $0x8] sm:$0xff]
    %848 = vrot.lane.b32.xlu0 %v838, 112
    %v849 = vpop.permute.xlu0 %848
    %850 = vrot.lane.b32.xlu0 %v841, 112
    %v851 = vpop.permute.xlu0 %850
    %v854 = vmul.f32 %v844, %v849
    %v855 = vmul.f32 %v845, %v851
    %v856 = vadd.f32 %v838, %v854
    %v857 = vadd.f32 %v841, %v855
    %v858 = vpack.c.bf16 %v857, %v856
    %v859 = vld [vmem:[%s6] sm:$0xf]
    %v860 = vld [vmem:[%s6 + $0x4] sm:$0xf]
    %v861 = vld [vmem:[%s7] sm:$0x1]
    %v863 = vlaneseq
    %v864 = vshrl.u32 %v863, 7
    %v865 = vsub.s32 0, %v864
    %v866 = vrot.slane %v861, %v865
    %v870 = vunpack.c.l.b16 %v859
    %v871 = vunpack.c.l.b16 %v860
    %v872 = vpack.c.b16 %v871, %v870
    %vm874 = vcmask 130048
    %v876 = vsel %vm874, %v858, 0
    %878 = vmatprep.subr.bf16.mxu0 0
    %879 = vmatpush1.bf16.msra.mxu0 %v872
    %880 = vmatprep.subr.bf16.mxu0 0
    %881 = vmatpush1.bf16.msra.mxu0 0
    %882 = vmatprep.subr.bf16.mxu0 0
    %883 = vmatpush1.bf16.msra.mxu0 0
    %884 = vmatprep.subr.bf16.mxu0 0
    %885 = vmatpush1.bf16.msra.mxu0 0
    %886 = vmatprep.subr.bf16.mxu0 0
    %887 = vmatpush1.bf16.msra.mxu0 0
    %888 = vmatprep.subr.bf16.mxu0 0
    %889 = vmatpush1.bf16.msra.mxu0 0
    %890 = vmatprep.subr.bf16.mxu0 0
    %891 = vmatpush1.bf16.msra.mxu0 0
    %892 = vmatprep.subr.bf16.mxu0 0
    %893 = vmatpush1.bf16.msra.mxu0 0
    %894 = vmatprep.subr.bf16.mxu0 0
    %895 = vmatpush1.bf16.msra.mxu0 0
    %896 = vmatprep.subr.bf16.mxu0 0
    %897 = vmatpush1.bf16.msra.mxu0 0
    %898 = vmatprep.subr.bf16.mxu0 0
    %899 = vmatpush1.bf16.msra.mxu0 0
    %900 = vmatprep.subr.bf16.mxu0 0
    %901 = vmatpush1.bf16.msra.mxu0 0
    %902 = vmatprep.subr.bf16.mxu0 0
    %903 = vmatpush1.bf16.msra.mxu0 0
    %904 = vmatprep.subr.bf16.mxu0 0
    %905 = vmatpush1.bf16.msra.mxu0 0
    %906 = vmatprep.subr.bf16.mxu0 0
    %907 = vmatpush1.bf16.msra.mxu0 0
    %908 = vmatprep.subr.bf16.mxu0 0
    %909 = vmatpush1.bf16.msra.mxu0 0
    %910 = vmatprep.mubr.bf16.mxu0 0
    %911 = vmatmul.mubr.bf16.gmra.mrb[0].mxu0 %v876
    %v912 = vpop.f32.mrb[0].mxu0
    %v913 = vadd.f32 %v866, %v912
    %v914 = vpop.f32.mrb[0].mxu0
    %v915 = vpop.f32.mrb[0].mxu0
    %v916 = vadd.f32 %v866, %v915
    %v917 = vpop.f32.mrb[0].mxu0
    %918 = vdwg.mxu0
    %v919 = vmax.f32 %v913, 0.0
    %v920 = vmax.f32 %v916, 0.0
    %v921 = vpack.c.bf16 %v920, %v919
    %v922 = vld [vmem:[#allocation4] sm:$0xff]
    %v923 = vld [vmem:[#allocation4 + $0x8] sm:$0xff]
    %v924 = vld [vmem:[#allocation4 + $0x10] sm:$0xff]
    %v925 = vld [vmem:[#allocation4 + $0x18] sm:$0xf]
    %v926 = vld [vmem:[#allocation4 + $0x1c] sm:$0xff]
    %v927 = vld [vmem:[#allocation4 + $0x24] sm:$0xff]
    %v928 = vld [vmem:[#allocation4 + $0x2c] sm:$0xff]
    %v929 = vld [vmem:[#allocation4 + $0x34] sm:$0xf]
    %v930 = vld [vmem:[#allocation4 + $0x38] sm:$0xff]
    %v931 = vld [vmem:[#allocation4 + $0x40] sm:$0xff]
    %v932 = vld [vmem:[#allocation4 + $0x48] sm:$0xff]
    %v933 = vld [vmem:[#allocation4 + $0x50] sm:$0xf]
    %v934 = vld [vmem:[#allocation4 + $0x54] sm:$0xff]
    %v935 = vld [vmem:[#allocation4 + $0x5c] sm:$0xff]
    %v936 = vld [vmem:[#allocation4 + $0x64] sm:$0xff]
    %v937 = vld [vmem:[#allocation4 + $0x6c] sm:$0xf]
    %v938 = vld [vmem:[#allocation4 + $0x70] sm:$0xff]
    %v939 = vld [vmem:[#allocation4 + $0x78] sm:$0xff]
    %v940 = vld [vmem:[#allocation4 + $0x80] sm:$0xff]
    %v941 = vld [vmem:[#allocation4 + $0x88] sm:$0xf]
    %v942 = vld [vmem:[#allocation4 + $0x8c] sm:$0xff]
    %v943 = vld [vmem:[#allocation4 + $0x94] sm:$0xff]
    %v944 = vld [vmem:[#allocation4 + $0x9c] sm:$0xff]
    %v945 = vld [vmem:[#allocation4 + $0xa4] sm:$0xf]
    %v946 = vld [vmem:[#allocation4 + $0xa8] sm:$0xff]
    %v947 = vld [vmem:[#allocation4 + $0xb0] sm:$0xff]
    %v948 = vld [vmem:[#allocation4 + $0xb8] sm:$0xff]
    %v949 = vld [vmem:[#allocation4 + $0xc0] sm:$0xf]
    %v950 = vld [vmem:[#allocation4 + $0xc4] sm:$0xff]
    %v951 = vld [vmem:[#allocation4 + $0xcc] sm:$0xff]
    %v952 = vld [vmem:[#allocation4 + $0xd4] sm:$0xff]
    %v953 = vld [vmem:[#allocation4 + $0xdc] sm:$0xf]
    %v954 = vld [vmem:[#allocation4 + $0xe0] sm:$0xff]
    %v955 = vld [vmem:[#allocation4 + $0xe8] sm:$0xff]
    %v956 = vld [vmem:[#allocation4 + $0xf0] sm:$0xff]
    %v957 = vld [vmem:[#allocation4 + $0xf8] sm:$0xf]
    %v958 = vld [vmem:[#allocation4 + $0xfc] sm:$0xff]
    %v959 = vld [vmem:[#allocation4 + $0x104] sm:$0xff]
    %v960 = vld [vmem:[#allocation4 + $0x10c] sm:$0xff]
    %v961 = vld [vmem:[#allocation4 + $0x114] sm:$0xf]
    %v962 = vld [vmem:[#allocation4 + $0x118] sm:$0xff]
    %v963 = vld [vmem:[#allocation4 + $0x120] sm:$0xff]
    %v964 = vld [vmem:[#allocation4 + $0x128] sm:$0xff]
    %v965 = vld [vmem:[#allocation4 + $0x130] sm:$0xf]
    %v966 = vld [vmem:[#allocation4 + $0x134] sm:$0xff]
    %v967 = vld [vmem:[#allocation4 + $0x13c] sm:$0xff]
    %v968 = vld [vmem:[#allocation4 + $0x144] sm:$0xff]
    %v969 = vld [vmem:[#allocation4 + $0x14c] sm:$0xf]
    %v970 = vld [vmem:[#allocation4 + $0x150] sm:$0xff]
    %v971 = vld [vmem:[#allocation4 + $0x158] sm:$0xff]
    %v972 = vld [vmem:[#allocation4 + $0x160] sm:$0xff]
    %v973 = vld [vmem:[#allocation4 + $0x168] sm:$0xf]
    %v974 = vld [vmem:[#allocation4 + $0x16c] sm:$0xff]
    %v975 = vld [vmem:[#allocation4 + $0x174] sm:$0xff]
    %v976 = vld [vmem:[#allocation4 + $0x17c] sm:$0xff]
    %v977 = vld [vmem:[#allocation4 + $0x184] sm:$0xf]
    %v978 = vld [vmem:[#allocation4 + $0x188] sm:$0xff]
    %v979 = vld [vmem:[#allocation4 + $0x190] sm:$0xff]
    %v980 = vld [vmem:[#allocation4 + $0x198] sm:$0xff]
    %v981 = vld [vmem:[#allocation4 + $0x1a0] sm:$0xf]
    %v982 = vld [vmem:[#allocation4 + $0x1a4] sm:$0xff]
    %v983 = vld [vmem:[#allocation4 + $0x1ac] sm:$0xff]
    %v984 = vld [vmem:[#allocation4 + $0x1b4] sm:$0xff]
    %v985 = vld [vmem:[#allocation4 + $0x1bc] sm:$0xf]
    %v986 = vld [vmem:[%s9] sm:$0xff]
    %v988 = vlaneseq
    %v989 = vshrl.u32 %v988, 7
    %v990 = vsub.s32 0, %v989
    %v991 = vrot.slane %v986, %v990
    %v992 = vlaneseq
    %v993 = vshrl.u32 %v992, 7
    %v994 = vsub.s32 1, %v993
    %v995 = vrot.slane %v986, %v994
    %v996 = vlaneseq
    %v997 = vshrl.u32 %v996, 7
    %v998 = vsub.s32 2, %v997
    %v999 = vrot.slane %v986, %v998
    %v1000 = vlaneseq
    %v1001 = vshrl.u32 %v1000, 7
    %v1002 = vsub.s32 3, %v1001
    %v1003 = vrot.slane %v986, %v1002
    %v1004 = vlaneseq
    %v1005 = vshrl.u32 %v1004, 7
    %v1006 = vsub.s32 4, %v1005
    %v1007 = vrot.slane %v986, %v1006
    %v1008 = vlaneseq
    %v1009 = vshrl.u32 %v1008, 7
    %v1010 = vsub.s32 5, %v1009
    %v1011 = vrot.slane %v986, %v1010
    %v1012 = vlaneseq
    %v1013 = vshrl.u32 %v1012, 7
    %v1014 = vsub.s32 6, %v1013
    %v1015 = vrot.slane %v986, %v1014
    %v1087 = vunpack.c.l.b16 %v922
    %v1088 = vunpack.c.h.b16 %v922
    %v1089 = vunpack.c.l.b16 %v923
    %v1090 = vunpack.c.h.b16 %v923
    %v1091 = vunpack.c.l.b16 %v924
    %v1092 = vunpack.c.h.b16 %v924
    %v1093 = vunpack.c.l.b16 %v925
    %v1094 = vunpack.c.l.b16 %v926
    %v1095 = vunpack.c.h.b16 %v926
    %v1096 = vunpack.c.l.b16 %v927
    %v1097 = vunpack.c.h.b16 %v927
    %v1098 = vunpack.c.l.b16 %v928
    %v1099 = vunpack.c.h.b16 %v928
    %v1100 = vunpack.c.l.b16 %v929
    %v1101 = vunpack.c.l.b16 %v930
    %v1102 = vunpack.c.h.b16 %v930
    %v1103 = vunpack.c.l.b16 %v931
    %v1104 = vunpack.c.h.b16 %v931
    %v1105 = vunpack.c.l.b16 %v932
    %v1106 = vunpack.c.h.b16 %v932
    %v1107 = vunpack.c.l.b16 %v933
    %v1108 = vunpack.c.l.b16 %v934
    %v1109 = vunpack.c.h.b16 %v934
    %v1110 = vunpack.c.l.b16 %v935
    %v1111 = vunpack.c.h.b16 %v935
    %v1112 = vunpack.c.l.b16 %v936
    %v1113 = vunpack.c.h.b16 %v936
    %v1114 = vunpack.c.l.b16 %v937
    %v1115 = vunpack.c.l.b16 %v938
    %v1116 = vunpack.c.h.b16 %v938
    %v1117 = vunpack.c.l.b16 %v939
    %v1118 = vunpack.c.h.b16 %v939
    %v1119 = vunpack.c.l.b16 %v940
    %v1120 = vunpack.c.h.b16 %v940
    %v1121 = vunpack.c.l.b16 %v941
    %v1122 = vunpack.c.l.b16 %v942
    %v1123 = vunpack.c.h.b16 %v942
    %v1124 = vunpack.c.l.b16 %v943
    %v1125 = vunpack.c.h.b16 %v943
    %v1126 = vunpack.c.l.b16 %v944
    %v1127 = vunpack.c.h.b16 %v944
    %v1128 = vunpack.c.l.b16 %v945
    %v1129 = vunpack.c.l.b16 %v946
    %v1130 = vunpack.c.h.b16 %v946
    %v1131 = vunpack.c.l.b16 %v947
    %v1132 = vunpack.c.h.b16 %v947
    %v1133 = vunpack.c.l.b16 %v948
    %v1134 = vunpack.c.h.b16 %v948
    %v1135 = vunpack.c.l.b16 %v949
    %v1136 = vunpack.c.l.b16 %v950
    %v1137 = vunpack.c.h.b16 %v950
    %v1138 = vunpack.c.l.b16 %v951
    %v1139 = vunpack.c.h.b16 %v951
    %v1140 = vunpack.c.l.b16 %v952
    %v1141 = vunpack.c.h.b16 %v952
    %v1142 = vunpack.c.l.b16 %v953
    %v1143 = vunpack.c.l.b16 %v954
    %v1144 = vunpack.c.h.b16 %v954
    %v1145 = vunpack.c.l.b16 %v955
    %v1146 = vunpack.c.h.b16 %v955
    %v1147 = vunpack.c.l.b16 %v956
    %v1148 = vunpack.c.h.b16 %v956
    %v1149 = vunpack.c.l.b16 %v957
    %v1150 = vunpack.c.l.b16 %v958
    %v1151 = vunpack.c.h.b16 %v958
    %v1152 = vunpack.c.l.b16 %v959
    %v1153 = vunpack.c.h.b16 %v959
    %v1154 = vunpack.c.l.b16 %v960
    %v1155 = vunpack.c.h.b16 %v960
    %v1156 = vunpack.c.l.b16 %v961
    %v1157 = vunpack.c.l.b16 %v962
    %v1158 = vunpack.c.h.b16 %v962
    %v1159 = vunpack.c.l.b16 %v963
    %v1160 = vunpack.c.h.b16 %v963
    %v1161 = vunpack.c.l.b16 %v964
    %v1162 = vunpack.c.h.b16 %v964
    %v1163 = vunpack.c.l.b16 %v965
    %v1164 = vunpack.c.l.b16 %v966
    %v1165 = vunpack.c.h.b16 %v966
    %v1166 = vunpack.c.l.b16 %v967
    %v1167 = vunpack.c.h.b16 %v967
    %v1168 = vunpack.c.l.b16 %v968
    %v1169 = vunpack.c.h.b16 %v968
    %v1170 = vunpack.c.l.b16 %v969
    %v1171 = vunpack.c.l.b16 %v970
    %v1172 = vunpack.c.h.b16 %v970
    %v1173 = vunpack.c.l.b16 %v971
    %v1174 = vunpack.c.h.b16 %v971
    %v1175 = vunpack.c.l.b16 %v972
    %v1176 = vunpack.c.h.b16 %v972
    %v1177 = vunpack.c.l.b16 %v973
    %v1178 = vunpack.c.l.b16 %v974
    %v1179 = vunpack.c.h.b16 %v974
    %v1180 = vunpack.c.l.b16 %v975
    %v1181 = vunpack.c.h.b16 %v975
    %v1182 = vunpack.c.l.b16 %v976
    %v1183 = vunpack.c.h.b16 %v976
    %v1184 = vunpack.c.l.b16 %v977
    %v1185 = vunpack.c.l.b16 %v978
    %v1186 = vunpack.c.h.b16 %v978
    %v1187 = vunpack.c.l.b16 %v979
    %v1188 = vunpack.c.h.b16 %v979
    %v1189 = vunpack.c.l.b16 %v980
    %v1190 = vunpack.c.h.b16 %v980
    %v1191 = vunpack.c.l.b16 %v981
    %v1192 = vunpack.c.l.b16 %v982
    %v1193 = vunpack.c.h.b16 %v982
    %v1194 = vunpack.c.l.b16 %v983
    %v1195 = vunpack.c.h.b16 %v983
    %v1196 = vunpack.c.l.b16 %v984
    %v1197 = vunpack.c.h.b16 %v984
    %v1198 = vunpack.c.l.b16 %v985
    %v1199 = vpack.c.b16 %v1094, %v1087
    %v1200 = vpack.c.b16 %v1095, %v1088
    %v1201 = vpack.c.b16 %v1096, %v1089
    %v1202 = vpack.c.b16 %v1097, %v1090
    %v1203 = vpack.c.b16 %v1098, %v1091
    %v1204 = vpack.c.b16 %v1099, %v1092
    %v1205 = vpack.c.b16 %v1100, %v1093
    %v1206 = vpack.c.b16 %v1108, %v1101
    %v1207 = vpack.c.b16 %v1109, %v1102
    %v1208 = vpack.c.b16 %v1110, %v1103
    %v1209 = vpack.c.b16 %v1111, %v1104
    %v1210 = vpack.c.b16 %v1112, %v1105
    %v1211 = vpack.c.b16 %v1113, %v1106
    %v1212 = vpack.c.b16 %v1114, %v1107
    %v1213 = vpack.c.b16 %v1122, %v1115
    %v1214 = vpack.c.b16 %v1123, %v1116
    %v1215 = vpack.c.b16 %v1124, %v1117
    %v1216 = vpack.c.b16 %v1125, %v1118
    %v1217 = vpack.c.b16 %v1126, %v1119
    %v1218 = vpack.c.b16 %v1127, %v1120
    %v1219 = vpack.c.b16 %v1128, %v1121
    %v1220 = vpack.c.b16 %v1136, %v1129
    %v1221 = vpack.c.b16 %v1137, %v1130
    %v1222 = vpack.c.b16 %v1138, %v1131
    %v1223 = vpack.c.b16 %v1139, %v1132
    %v1224 = vpack.c.b16 %v1140, %v1133
    %v1225 = vpack.c.b16 %v1141, %v1134
    %v1226 = vpack.c.b16 %v1142, %v1135
    %v1227 = vpack.c.b16 %v1150, %v1143
    %v1228 = vpack.c.b16 %v1151, %v1144
    %v1229 = vpack.c.b16 %v1152, %v1145
    %v1230 = vpack.c.b16 %v1153, %v1146
    %v1231 = vpack.c.b16 %v1154, %v1147
    %v1232 = vpack.c.b16 %v1155, %v1148
    %v1233 = vpack.c.b16 %v1156, %v1149
    %v1234 = vpack.c.b16 %v1164, %v1157
    %v1235 = vpack.c.b16 %v1165, %v1158
    %v1236 = vpack.c.b16 %v1166, %v1159
    %v1237 = vpack.c.b16 %v1167, %v1160
    %v1238 = vpack.c.b16 %v1168, %v1161
    %v1239 = vpack.c.b16 %v1169, %v1162
    %v1240 = vpack.c.b16 %v1170, %v1163
    %v1241 = vpack.c.b16 %v1178, %v1171
    %v1242 = vpack.c.b16 %v1179, %v1172
    %v1243 = vpack.c.b16 %v1180, %v1173
    %v1244 = vpack.c.b16 %v1181, %v1174
    %v1245 = vpack.c.b16 %v1182, %v1175
    %v1246 = vpack.c.b16 %v1183, %v1176
    %v1247 = vpack.c.b16 %v1184, %v1177
    %v1248 = vpack.c.b16 %v1192, %v1185
    %v1249 = vpack.c.b16 %v1193, %v1186
    %v1250 = vpack.c.b16 %v1194, %v1187
    %v1251 = vpack.c.b16 %v1195, %v1188
    %v1252 = vpack.c.b16 %v1196, %v1189
    %v1253 = vpack.c.b16 %v1197, %v1190
    %v1254 = vpack.c.b16 %v1198, %v1191
    %1311 = vmatprep.subr.bf16.mxu0 %v1200
    %1312 = vmatpush1.bf16.msra.mxu0 %v1199
    %1313 = vmatprep.subr.bf16.mxu0 %v1207
    %1314 = vmatpush1.bf16.msra.mxu0 %v1206
    %1315 = vmatprep.subr.bf16.mxu0 %v1214
    %1316 = vmatpush1.bf16.msra.mxu0 %v1213
    %1317 = vmatprep.subr.bf16.mxu0 %v1221
    %1318 = vmatpush1.bf16.msra.mxu0 %v1220
    %1319 = vmatprep.subr.bf16.mxu0 %v1228
    %1320 = vmatpush1.bf16.msra.mxu0 %v1227
    %1321 = vmatprep.subr.bf16.mxu0 %v1235
    %1322 = vmatpush1.bf16.msra.mxu0 %v1234
    %1323 = vmatprep.subr.bf16.mxu0 %v1242
    %1324 = vmatpush1.bf16.msra.mxu0 %v1241
    %1325 = vmatprep.subr.bf16.mxu0 %v1249
    %1326 = vmatpush1.bf16.msra.mxu0 %v1248
    %1327 = vmatprep.subr.bf16.mxu0 0
    %1328 = vmatpush1.bf16.msra.mxu0 0
    %1329 = vmatprep.subr.bf16.mxu0 0
    %1330 = vmatpush1.bf16.msra.mxu0 0
    %1331 = vmatprep.subr.bf16.mxu0 0
    %1332 = vmatpush1.bf16.msra.mxu0 0
    %1333 = vmatprep.subr.bf16.mxu0 0
    %1334 = vmatpush1.bf16.msra.mxu0 0
    %1335 = vmatprep.subr.bf16.mxu0 0
    %1336 = vmatpush1.bf16.msra.mxu0 0
    %1337 = vmatprep.subr.bf16.mxu0 0
    %1338 = vmatpush1.bf16.msra.mxu0 0
    %1339 = vmatprep.subr.bf16.mxu0 0
    %1340 = vmatpush1.bf16.msra.mxu0 0
    %1341 = vmatprep.subr.bf16.mxu0 0
    %1342 = vmatpush1.bf16.msra.mxu0 0
    %1343 = vmatprep.mubr.bf16.mxu0 0
    %1344 = vmatmul.mubr.bf16.gmra.mrb[0].mxu0 %v921
    %v1345 = vpop.f32.mrb[0].mxu0
    %v1346 = vadd.f32 %v991, %v1345
    %v1347 = vpop.f32.mrb[0].mxu0
    %v1348 = vadd.f32 %v995, %v1347
    %v1349 = vpop.f32.mrb[0].mxu0
    %v1350 = vadd.f32 %v991, %v1349
    %v1351 = vpop.f32.mrb[0].mxu0
    %v1352 = vadd.f32 %v995, %v1351
    %1353 = vdwg.mxu0
    %1354 = vmatprep.subr.bf16.mxu0 %v1202
    %1355 = vmatpush1.bf16.msra.mxu0 %v1201
    %1356 = vmatprep.subr.bf16.mxu0 %v1209
    %1357 = vmatpush1.bf16.msra.mxu0 %v1208
    %1358 = vmatprep.subr.bf16.mxu0 %v1216
    %1359 = vmatpush1.bf16.msra.mxu0 %v1215
    %1360 = vmatprep.subr.bf16.mxu0 %v1223
    %1361 = vmatpush1.bf16.msra.mxu0 %v1222
    %1362 = vmatprep.subr.bf16.mxu0 %v1230
    %1363 = vmatpush1.bf16.msra.mxu0 %v1229
    %1364 = vmatprep.subr.bf16.mxu0 %v1237
    %1365 = vmatpush1.bf16.msra.mxu0 %v1236
    %1366 = vmatprep.subr.bf16.mxu0 %v1244
    %1367 = vmatpush1.bf16.msra.mxu0 %v1243
    %1368 = vmatprep.subr.bf16.mxu0 %v1251
    %1369 = vmatpush1.bf16.msra.mxu0 %v1250
    %1370 = vmatprep.subr.bf16.mxu0 0
    %1371 = vmatpush1.bf16.msra.mxu0 0
    %1372 = vmatprep.subr.bf16.mxu0 0
    %1373 = vmatpush1.bf16.msra.mxu0 0
    %1374 = vmatprep.subr.bf16.mxu0 0
    %1375 = vmatpush1.bf16.msra.mxu0 0
    %1376 = vmatprep.subr.bf16.mxu0 0
    %1377 = vmatpush1.bf16.msra.mxu0 0
    %1378 = vmatprep.subr.bf16.mxu0 0
    %1379 = vmatpush1.bf16.msra.mxu0 0
    %1380 = vmatprep.subr.bf16.mxu0 0
    %1381 = vmatpush1.bf16.msra.mxu0 0
    %1382 = vmatprep.subr.bf16.mxu0 0
    %1383 = vmatpush1.bf16.msra.mxu0 0
    %1384 = vmatprep.subr.bf16.mxu0 0
    %1385 = vmatpush1.bf16.msra.mxu0 0
    %1386 = vmatprep.mubr.bf16.mxu0 0
    %1387 = vmatmul.mubr.bf16.gmra.mrb[0].mxu0 %v921
    %v1388 = vpop.f32.mrb[0].mxu0
    %v1389 = vadd.f32 %v999, %v1388
    %v1390 = vpop.f32.mrb[0].mxu0
    %v1391 = vadd.f32 %v1003, %v1390
    %v1392 = vpop.f32.mrb[0].mxu0
    %v1393 = vadd.f32 %v999, %v1392
    %v1394 = vpop.f32.mrb[0].mxu0
    %v1395 = vadd.f32 %v1003, %v1394
    %1396 = vdwg.mxu0
    %1397 = vmatprep.subr.bf16.mxu0 %v1204
    %1398 = vmatpush1.bf16.msra.mxu0 %v1203
    %1399 = vmatprep.subr.bf16.mxu0 %v1211
    %1400 = vmatpush1.bf16.msra.mxu0 %v1210
    %1401 = vmatprep.subr.bf16.mxu0 %v1218
    %1402 = vmatpush1.bf16.msra.mxu0 %v1217
    %1403 = vmatprep.subr.bf16.mxu0 %v1225
    %1404 = vmatpush1.bf16.msra.mxu0 %v1224
    %1405 = vmatprep.subr.bf16.mxu0 %v1232
    %1406 = vmatpush1.bf16.msra.mxu0 %v1231
    %1407 = vmatprep.subr.bf16.mxu0 %v1239
    %1408 = vmatpush1.bf16.msra.mxu0 %v1238
    %1409 = vmatprep.subr.bf16.mxu0 %v1246
    %1410 = vmatpush1.bf16.msra.mxu0 %v1245
    %1411 = vmatprep.subr.bf16.mxu0 %v1253
    %1412 = vmatpush1.bf16.msra.mxu0 %v1252
    %1413 = vmatprep.subr.bf16.mxu0 0
    %1414 = vmatpush1.bf16.msra.mxu0 0
    %1415 = vmatprep.subr.bf16.mxu0 0
    %1416 = vmatpush1.bf16.msra.mxu0 0
    %1417 = vmatprep.subr.bf16.mxu0 0
    %1418 = vmatpush1.bf16.msra.mxu0 0
    %1419 = vmatprep.subr.bf16.mxu0 0
    %1420 = vmatpush1.bf16.msra.mxu0 0
    %1421 = vmatprep.subr.bf16.mxu0 0
    %1422 = vmatpush1.bf16.msra.mxu0 0
    %1423 = vmatprep.subr.bf16.mxu0 0
    %1424 = vmatpush1.bf16.msra.mxu0 0
    %1425 = vmatprep.subr.bf16.mxu0 0
    %1426 = vmatpush1.bf16.msra.mxu0 0
    %1427 = vmatprep.subr.bf16.mxu0 0
    %1428 = vmatpush1.bf16.msra.mxu0 0
    %1429 = vmatprep.mubr.bf16.mxu0 0
    %1430 = vmatmul.mubr.bf16.gmra.mrb[0].mxu0 %v921
    %v1431 = vpop.f32.mrb[0].mxu0
    %v1432 = vadd.f32 %v1007, %v1431
    %v1433 = vpop.f32.mrb[0].mxu0
    %v1434 = vadd.f32 %v1011, %v1433
    %v1435 = vpop.f32.mrb[0].mxu0
    %v1436 = vadd.f32 %v1007, %v1435
    %v1437 = vpop.f32.mrb[0].mxu0
    %v1438 = vadd.f32 %v1011, %v1437
    %1439 = vdwg.mxu0
    %1440 = vmatprep.subr.bf16.mxu0 0
    %1441 = vmatpush1.bf16.msra.mxu0 %v1205
    %1442 = vmatprep.subr.bf16.mxu0 0
    %1443 = vmatpush1.bf16.msra.mxu0 %v1212
    %1444 = vmatprep.subr.bf16.mxu0 0
    %1445 = vmatpush1.bf16.msra.mxu0 %v1219
    %1446 = vmatprep.subr.bf16.mxu0 0
    %1447 = vmatpush1.bf16.msra.mxu0 %v1226
    %1448 = vmatprep.subr.bf16.mxu0 0
    %1449 = vmatpush1.bf16.msra.mxu0 %v1233
    %1450 = vmatprep.subr.bf16.mxu0 0
    %1451 = vmatpush1.bf16.msra.mxu0 %v1240
    %1452 = vmatprep.subr.bf16.mxu0 0
    %1453 = vmatpush1.bf16.msra.mxu0 %v1247
    %1454 = vmatprep.subr.bf16.mxu0 0
    %1455 = vmatpush1.bf16.msra.mxu0 %v1254
    %1456 = vmatprep.subr.bf16.mxu0 0
    %1457 = vmatpush1.bf16.msra.mxu0 0
    %1458 = vmatprep.subr.bf16.mxu0 0
    %1459 = vmatpush1.bf16.msra.mxu0 0
    %1460 = vmatprep.subr.bf16.mxu0 0
    %1461 = vmatpush1.bf16.msra.mxu0 0
    %1462 = vmatprep.subr.bf16.mxu0 0
    %1463 = vmatpush1.bf16.msra.mxu0 0
    %1464 = vmatprep.subr.bf16.mxu0 0
    %1465 = vmatpush1.bf16.msra.mxu0 0
    %1466 = vmatprep.subr.bf16.mxu0 0
    %1467 = vmatpush1.bf16.msra.mxu0 0
    %1468 = vmatprep.subr.bf16.mxu0 0
    %1469 = vmatpush1.bf16.msra.mxu0 0
    %1470 = vmatprep.subr.bf16.mxu0 0
    %1471 = vmatpush1.bf16.msra.mxu0 0
    %1472 = vmatprep.mubr.bf16.mxu0 0
    %1473 = vmatmul.mubr.bf16.gmra.mrb[0].mxu0 %v921
    %v1474 = vpop.f32.mrb[0].mxu0
    %v1475 = vadd.f32 %v1015, %v1474
    %v1476 = vpop.f32.mrb[0].mxu0
    %v1477 = vpop.f32.mrb[0].mxu0
    %v1478 = vadd.f32 %v1015, %v1477
    %v1479 = vpop.f32.mrb[0].mxu0
    %1480 = vdwg.mxu0
    %v1481 = vxor.u32 %v1346, 2147483648
    %v1482 = vxor.u32 %v1348, 2147483648
    %v1483 = vxor.u32 %v1389, 2147483648
    %v1484 = vxor.u32 %v1391, 2147483648
    %v1485 = vxor.u32 %v1432, 2147483648
    %v1486 = vxor.u32 %v1434, 2147483648
    %v1487 = vxor.u32 %v1475, 2147483648
    %v1488 = vxor.u32 %v1350, 2147483648
    %v1489 = vxor.u32 %v1352, 2147483648
    %v1490 = vxor.u32 %v1393, 2147483648
    %v1491 = vxor.u32 %v1395, 2147483648
    %v1492 = vxor.u32 %v1436, 2147483648
    %v1493 = vxor.u32 %v1438, 2147483648
    %v1494 = vxor.u32 %v1478, 2147483648
    %v1495 = vmul.f32 %v1481, 1.442695
    %v1496 = vpow.pop %v1495
    %v1497 = vmul.f32 %v1482, 1.442695
    %v1498 = vpow.pop %v1497
    %v1499 = vmul.f32 %v1483, 1.442695
    %v1500 = vpow.pop %v1499
    %v1501 = vmul.f32 %v1484, 1.442695
    %v1502 = vpow.pop %v1501
    %v1503 = vmul.f32 %v1485, 1.442695
    %v1504 = vpow.pop %v1503
    %v1505 = vmul.f32 %v1486, 1.442695
    %v1506 = vpow.pop %v1505
    %v1507 = vmul.f32 %v1487, 1.442695
    %v1508 = vpow.pop %v1507
    %v1509 = vmul.f32 %v1488, 1.442695
    %v1510 = vpow.pop %v1509
    %v1511 = vmul.f32 %v1489, 1.442695
    %v1512 = vpow.pop %v1511
    %v1513 = vmul.f32 %v1490, 1.442695
    %v1514 = vpow.pop %v1513
    %v1515 = vmul.f32 %v1491, 1.442695
    %v1516 = vpow.pop %v1515
    %v1517 = vmul.f32 %v1492, 1.442695
    %v1518 = vpow.pop %v1517
    %v1519 = vmul.f32 %v1493, 1.442695
    %v1520 = vpow.pop %v1519
    %v1521 = vmul.f32 %v1494, 1.442695
    %v1522 = vpow.pop %v1521
    %v1523 = vadd.f32 %v1496, 1.0
    %v1524 = vadd.f32 %v1498, 1.0
    %v1525 = vadd.f32 %v1500, 1.0
    %v1526 = vadd.f32 %v1502, 1.0
    %v1527 = vadd.f32 %v1504, 1.0
    %v1528 = vadd.f32 %v1506, 1.0
    %v1529 = vadd.f32 %v1508, 1.0
    %v1530 = vadd.f32 %v1510, 1.0
    %v1531 = vadd.f32 %v1512, 1.0
    %v1532 = vadd.f32 %v1514, 1.0
    %v1533 = vadd.f32 %v1516, 1.0
    %v1534 = vadd.f32 %v1518, 1.0
    %v1535 = vadd.f32 %v1520, 1.0
    %v1536 = vadd.f32 %v1522, 1.0
    %v1537 = vrcp.pop %v1523
    %v1538 = vmul.f32 1.0, %v1537
    %v1539 = vrcp.pop %v1524
    %v1540 = vmul.f32 1.0, %v1539
    %v1541 = vrcp.pop %v1525
    %v1542 = vmul.f32 1.0, %v1541
    %v1543 = vrcp.pop %v1526
    %v1544 = vmul.f32 1.0, %v1543
    %v1545 = vrcp.pop %v1527
    %v1546 = vmul.f32 1.0, %v1545
    %v1547 = vrcp.pop %v1528
    %v1548 = vmul.f32 1.0, %v1547
    %v1549 = vrcp.pop %v1529
    %v1550 = vmul.f32 1.0, %v1549
    %v1551 = vrcp.pop %v1530
    %v1552 = vmul.f32 1.0, %v1551
    %v1553 = vrcp.pop %v1531
    %v1554 = vmul.f32 1.0, %v1553
    %v1555 = vrcp.pop %v1532
    %v1556 = vmul.f32 1.0, %v1555
    %v1557 = vrcp.pop %v1533
    %v1558 = vmul.f32 1.0, %v1557
    %v1559 = vrcp.pop %v1534
    %v1560 = vmul.f32 1.0, %v1559
    %v1561 = vrcp.pop %v1535
    %v1562 = vmul.f32 1.0, %v1561
    %v1563 = vrcp.pop %v1536
    %v1564 = vmul.f32 1.0, %v1563
    %1565 = vst [vmem:[%s10] sm:$0xff] %v1538
    %1566 = vst [vmem:[%s10 + $0x8] sm:$0xff] %v1540
    %1567 = vst [vmem:[%s10 + $0x10] sm:$0xff] %v1542
    %1568 = vst [vmem:[%s10 + $0x18] sm:$0xff] %v1544
    %1569 = vst [vmem:[%s10 + $0x20] sm:$0xff] %v1546
    %1570 = vst [vmem:[%s10 + $0x28] sm:$0xff] %v1548
    %1571 = vst [vmem:[%s10 + $0x30] sm:$0xff] %v1550
    %1572 = vst [vmem:[%s10 + $0x38] sm:$0xff] %v1552
    %1573 = vst [vmem:[%s10 + $0x40] sm:$0xff] %v1554
    %1574 = vst [vmem:[%s10 + $0x48] sm:$0xff] %v1556
    %1575 = vst [vmem:[%s10 + $0x50] sm:$0xff] %v1558
    %1576 = vst [vmem:[%s10 + $0x58] sm:$0xff] %v1560
    %1577 = vst [vmem:[%s10 + $0x60] sm:$0xff] %v1562
    %1578 = vst [vmem:[%s10 + $0x68] sm:$0xff] %v1564
    %vm1579 = vcmask 261120
    %1580 = vst.msk [vmem:[%s11] sm:$0xff] %vm1579, %v838
    %1581 = vst.msk [vmem:[%s11 + $0x8] sm:$0xff] %vm1579, %v841
    // Predicated region
    $region50: #{vae_forward.1} parent=1 // pred_check
      _
    $region51: #{vae_forward.1} parent=1 // pred_check_branch
      %1583 = sbr.rel (0) target = $region53
    $region52: #{vae_forward.1} parent=1 // pred_region
      _
    $region53: #{vae_forward.1} parent=1 // pred_fallthru
      _
    // Predicated region
    $region54: #{vae_forward.1} parent=1 // pred_check
      _
    $region55: #{vae_forward.1} parent=1 // pred_check_branch
      %1585 = sbr.rel (0) target = $region57
    $region56: #{vae_forward.1} parent=1 // pred_region
      _
    $region57: #{vae_forward.1} parent=1 // pred_fallthru
      _
    // Predicated region
    $region58: #{vae_forward.1} parent=1 // pred_check
      _
    $region59: #{vae_forward.1} parent=1 // pred_check_branch
      %1587 = sbr.rel (0) target = $region61
    $region60: #{vae_forward.1} parent=1 // pred_region
      _
    $region61: #{vae_forward.1} parent=1 // pred_fallthru
      _
    // Predicated region
    $region62: #{vae_forward.1} parent=1 // pred_check
      _
    $region63: #{vae_forward.1} parent=1 // pred_check_branch
      %1589 = sbr.rel (0) target = $region65
    $region64: #{vae_forward.1} parent=1 // pred_region
      _
    $region65: #{vae_forward.1} parent=1 // pred_fallthru
      _
    %1590 = vsyncpa [#allocation3], 1
    %1591 = vsyncpa [#allocation5], 1

</llo_original>
